<compile_context>
chip_gen: v6e
topology: v6e:2x2x1
jax: 0.10.0
libtpu: 0.0.40
codegen_flags: <defaults>
</compile_context>

<pallas_src>
import math
import jax
import jax.numpy as jnp
from jax import lax
from jax.experimental import pallas as pl
from jax.experimental.pallas import tpu as pltpu

# ---------------- config (small, consistent with the module) ----------------
D_MODEL = 32
NHEAD = 4
DIM_FF = 64
T_LEN = 8     # tgt sequence length (query)
S_LEN = 16    # src sequence length (key/value)
BATCH = 2
LN_EPS = 1e-5
HEAD_DIM = D_MODEL // NHEAD


def transformer_kernel(x_ref, w_ref, p_ref, o_ref, ctx_ref):
    D, F = D_MODEL, DIM_FF
    T, S, B = T_LEN, S_LEN, BATCH
    H, hd = NHEAD, HEAD_DIM
    BT = B * T

    x = x_ref[...]                                  # (B*T + B*S, D): [tgt ; src]

    # ---- fused Q/K/V projection: one matmul over the whole activation slab ----
    # weight-slab columns: [WqT*scale | WkT | WvT | WoT | W1T | W2]
    qkv = jnp.dot(x, w_ref[:, 0:3 * D],
                  preferred_element_type=jnp.float32) + p_ref[0:1, 0:3 * D]
    q = qkv[0:BT, 0:D]              # tgt rows; already scaled by 1/sqrt(hd)
    k = qkv[BT:, D:2 * D]           # src rows
    v = qkv[BT:, 2 * D:3 * D]       # src rows

    # ---- per-(batch, head) attention; results written straight to scratch ----
    # TODO(synk): attn_mask / key_padding_mask paths not implemented (None here).
    for b in range(B):
        q_b = q[b * T:(b + 1) * T, :]               # (T, D)
        k_b = k[b * S:(b + 1) * S, :]               # (S, D)
        v_b = v[b * S:(b + 1) * S, :]               # (S, D)
        for h in range(H):
            lo, hi = h * hd, (h + 1) * hd
            # contract last dims of both operands -> no explicit K transpose
            s_h = lax.dot_general(q_b[:, lo:hi], k_b[:, lo:hi],
                                  (((1,), (1,)), ((), ())),
                                  preferred_element_type=jnp.float32)   # (T, S)
            s_h = s_h - jnp.max(s_h, axis=-1, keepdims=True)
            e_h = jnp.exp(s_h)
            p_h = e_h / jnp.sum(e_h, axis=-1, keepdims=True)            # exact
            ctx_ref[b * T:(b + 1) * T, lo:hi] = jnp.dot(
                p_h, v_b[:, lo:hi], preferred_element_type=jnp.float32)

    # ---- output projection, residual + LN1, FFN (relu), residual + LN2 ----
    attn = jnp.dot(ctx_ref[...], w_ref[:, 3 * D:4 * D],
                   preferred_element_type=jnp.float32) + p_ref[1:2, 0:D]

    def layer_norm(xv, g, beta):
        mu = jnp.mean(xv, axis=-1, keepdims=True)
        xc = xv - mu
        var = jnp.mean(xc * xc, axis=-1, keepdims=True)
        return xc * lax.rsqrt(var + LN_EPS) * g + beta

    # dropout / dropout1 / dropout2 are identity (eval-mode semantics).
    x1 = layer_norm(x[0:BT, :] + attn, p_ref[4:5, 0:D], p_ref[5:6, 0:D])
    h1 = jnp.maximum(jnp.dot(x1, w_ref[:, 4 * D:4 * D + F],
                             preferred_element_type=jnp.float32)
                     + p_ref[2:3, 0:F], 0.0)
    # W2 stored un-transposed (D, F): contract dim 1 of h1 with dim 1 of W2
    ff = lax.dot_general(h1, w_ref[:, 4 * D + F:4 * D + 2 * F],
                         (((1,), (1,)), ((), ())),
                         preferred_element_type=jnp.float32) + p_ref[3:4, 0:D]
    y = layer_norm(x1 + ff, p_ref[6:7, 0:D], p_ref[7:8, 0:D])

    o_ref[...] = y.astype(o_ref.dtype)


def pack_params(params):
    """One-time packing at init; NOT part of the jit'd per-call path."""
    (wq, wk, wv, bq, bk, bv, wo, bo,
     w1, b1, w2, b2, g1, be1, g2, be2) = params
    scale = 1.0 / math.sqrt(HEAD_DIM)

    # (32, 256): 32-wide blocks share lanes 0..127; 64-wide blocks at 128 / 192
    wslab = jnp.concatenate(
        [wq.T * scale, wk.T, wv.T, wo.T, w1.T, w2], axis=1).astype(jnp.float32)

    def row(vec):
        vec = jnp.reshape(vec, (1, -1))
        return jnp.pad(vec, ((0, 0), (0, 128 - vec.shape[1])))

    pslab = jnp.concatenate([
        row(jnp.concatenate([bq.reshape(-1) * scale, bk.reshape(-1), bv.reshape(-1)])),
        row(bo), row(b1), row(b2), row(g1), row(be1), row(g2), row(be2)],
        axis=0).astype(jnp.float32)                  # (8, 128) = one f32 tile
    return wslab, pslab


@jax.jit
def transformer_pallas(src_sbd, tgt_tbd, wslab, pslab):
    """src: (S, B, D), tgt: (T, B, D)  [PyTorch seq-first].  Returns (T, B, D)."""
    tgt = jnp.transpose(tgt_tbd, (1, 0, 2)).reshape(BATCH * T_LEN, D_MODEL)
    src = jnp.transpose(src_sbd, (1, 0, 2)).reshape(BATCH * S_LEN, D_MODEL)
    x = jnp.concatenate([tgt, src], axis=0)          # (B*T + B*S, D) activation slab

    BT = BATCH * T_LEN
    vmem = pltpu.MemorySpace.VMEM
    out = pl.pallas_call(
        transformer_kernel,
        out_shape=jax.ShapeDtypeStruct((BT, D_MODEL), jnp.float32),
        in_specs=[pl.BlockSpec(memory_space=vmem),
                  pl.BlockSpec(memory_space=vmem),
                  pl.BlockSpec(memory_space=vmem)],
        out_specs=pl.BlockSpec(memory_space=vmem),
        scratch_shapes=[pltpu.VMEM((BT, D_MODEL), jnp.float32)],
    )(x, wslab, pslab)

    return jnp.transpose(out.reshape(BATCH, T_LEN, D_MODEL), (1, 0, 2))


def reference_jax(src_sbd, tgt_tbd, params):
    """Pure-JAX reference matching PyTorch Transformer.forward (eval mode)."""
    (wq, wk, wv, bq, bk, bv, wo, bo,
     w1, b1, w2, b2, g1, be1, g2, be2) = params
    src = jnp.transpose(src_sbd, (1, 0, 2))
    tgt = jnp.transpose(tgt_tbd, (1, 0, 2))
    B, T, D = tgt.shape
    S = src.shape[1]
    H, hd = NHEAD, HEAD_DIM

    q = tgt @ wq.T + bq[0]
    k = src @ wk.T + bk[0]
    v = src @ wv.T + bv[0]
    qh = q.reshape(B, T, H, hd)
    kh = k.reshape(B, S, H, hd)
    vh = v.reshape(B, S, H, hd)
    scores = jnp.einsum('bthd,bshd->bhts', qh, kh) / math.sqrt(hd)
    p = jax.nn.softmax(scores, axis=-1)
    ctx = jnp.einsum('bhts,bshd->bthd', p, vh).reshape(B, T, D)
    attn = ctx @ wo.T + bo[0]

    def ln(x, g, be):
        mu = x.mean(-1, keepdims=True)
        var = ((x - mu) ** 2).mean(-1, keepdims=True)
        return (x - mu) / jnp.sqrt(var + LN_EPS) * g[0] + be[0]

    x = ln(tgt + attn, g1, be1)
    ff = jnp.maximum(x @ w1.T + b1[0], 0.0) @ w2.T + b2[0]
    y = ln(x + ff, g2, be2)
    return jnp.transpose(y, (1, 0, 2))


def init_params(key):
    ks = jax.random.split(key, 16)
    s = 0.1
    wq = jax.random.normal(ks[0], (D_MODEL, D_MODEL), jnp.float32) * s
    wk = jax.random.normal(ks[1], (D_MODEL, D_MODEL), jnp.float32) * s
    wv = jax.random.normal(ks[2], (D_MODEL, D_MODEL), jnp.float32) * s
    bq = jax.random.normal(ks[3], (1, D_MODEL), jnp.float32) * s
    bk = jax.random.normal(ks[4], (1, D_MODEL), jnp.float32) * s
    bv = jax.random.normal(ks[5], (1, D_MODEL), jnp.float32) * s
    wo = jax.random.normal(ks[6], (D_MODEL, D_MODEL), jnp.float32) * s
    bo = jax.random.normal(ks[7], (1, D_MODEL), jnp.float32) * s
    w1 = jax.random.normal(ks[8], (DIM_FF, D_MODEL), jnp.float32) * s
    b1 = jax.random.normal(ks[9], (1, DIM_FF), jnp.float32) * s
    w2 = jax.random.normal(ks[10], (D_MODEL, DIM_FF), jnp.float32) * s
    b2 = jax.random.normal(ks[11], (1, D_MODEL), jnp.float32) * s
    g1 = 1.0 + 0.1 * jax.random.normal(ks[12], (1, D_MODEL), jnp.float32)
    be1 = 0.1 * jax.random.normal(ks[13], (1, D_MODEL), jnp.float32)
    g2 = 1.0 + 0.1 * jax.random.normal(ks[14], (1, D_MODEL), jnp.float32)
    be2 = 0.1 * jax.random.normal(ks[15], (1, D_MODEL), jnp.float32)
    return (wq, wk, wv, bq, bk, bv, wo, bo, w1, b1, w2, b2, g1, be1, g2, be2)


if __name__ == "__main__":
    key = jax.random.PRNGKey(0)
    k_src, k_tgt, k_p = jax.random.split(key, 3)
    src = jax.random.normal(k_src, (S_LEN, BATCH, D_MODEL), jnp.float32)
    tgt = jax.random.normal(k_tgt, (T_LEN, BATCH, D_MODEL), jnp.float32)
    params = init_params(k_p)

    # one-time packing, outside the jit'd per-call path
    wslab, pslab = pack_params(params)
    wslab = jax.block_until_ready(wslab)
    pslab = jax.block_until_ready(pslab)

    out = jax.block_until_ready(transformer_pallas(src, tgt, wslab, pslab))

    ref = reference_jax(src, tgt, params)
    assert out.shape == (T_LEN, BATCH, D_MODEL)
    err = float(jnp.max(jnp.abs(out - ref)))
    # tolerance covers TPU default-precision matmul differences (softmax is exact now)
    assert err < 2e-3, f"mismatch vs JAX reference: {err}"
    print("KERNEL_OK")
</pallas_src>

<mosaic_0001>
module attributes {stable_mosaic.version = 11 : i64} {
  func.func @transformer_kernel(%arg0: memref<48x32xf32, #tpu.memory_space<vmem>>, %arg1: memref<32x256xf32, #tpu.memory_space<vmem>>, %arg2: memref<8x128xf32, #tpu.memory_space<vmem>>, %arg3: memref<16x32xf32, #tpu.memory_space<vmem>>, %arg4: memref<16x32xf32, #tpu.memory_space<vmem>>) attributes {dimension_semantics = [], scalar_prefetch = 0 : i64, scratch_operands = 1 : i64, tpu.core_type = #tpu.core_type<tc>} {
    %c0 = arith.constant 0 : index
    %c0_0 = arith.constant 0 : index
    %0 = vector.load %arg0[%c0, %c0_0] : memref<48x32xf32, #tpu.memory_space<vmem>>, vector<48x32xf32>
    %c0_1 = arith.constant 0 : index
    %c0_2 = arith.constant 0 : index
    %1 = vector.load %arg1[%c0_1, %c0_2] : memref<32x256xf32, #tpu.memory_space<vmem>>, vector<32x96xf32>
    %cst = arith.constant dense<0.000000e+00> : vector<48x96xf32>
    %2 = tpu.matmul %0, %1, %cst {dimension_numbers = #tpu.dot_dimension_numbers<[1], [0], [0], [1], [0, 0, 1, 1], [], []>} : vector<48x32xf32>, vector<32x96xf32>, vector<48x96xf32> -> vector<48x96xf32>
    %c0_3 = arith.constant 0 : index
    %c0_4 = arith.constant 0 : index
    %3 = vector.load %arg2[%c0_3, %c0_4] : memref<8x128xf32, #tpu.memory_space<vmem>>, vector<1x96xf32>
    %4 = vector.broadcast %3 : vector<1x96xf32> to vector<48x96xf32>
    %5 = arith.addf %2, %4 : vector<48x96xf32>
    %6 = vector.extract_strided_slice %5 {offsets = [0, 0], sizes = [16, 32], strides = [1, 1]} : vector<48x96xf32> to vector<16x32xf32>
    %7 = vector.extract_strided_slice %5 {offsets = [16, 32], sizes = [32, 32], strides = [1, 1]} : vector<48x96xf32> to vector<32x32xf32>
    %8 = vector.extract_strided_slice %5 {offsets = [16, 64], sizes = [32, 32], strides = [1, 1]} : vector<48x96xf32> to vector<32x32xf32>
    %9 = vector.extract_strided_slice %6 {offsets = [0, 0], sizes = [8, 32], strides = [1, 1]} : vector<16x32xf32> to vector<8x32xf32>
    %10 = vector.extract_strided_slice %7 {offsets = [0, 0], sizes = [16, 32], strides = [1, 1]} : vector<32x32xf32> to vector<16x32xf32>
    %11 = vector.extract_strided_slice %8 {offsets = [0, 0], sizes = [16, 32], strides = [1, 1]} : vector<32x32xf32> to vector<16x32xf32>
    %12 = vector.extract_strided_slice %9 {offsets = [0, 0], sizes = [8, 8], strides = [1, 1]} : vector<8x32xf32> to vector<8x8xf32>
    %13 = vector.extract_strided_slice %10 {offsets = [0, 0], sizes = [16, 8], strides = [1, 1]} : vector<16x32xf32> to vector<16x8xf32>
    %cst_5 = arith.constant dense<0.000000e+00> : vector<8x16xf32>
    %14 = tpu.matmul %12, %13, %cst_5 {dimension_numbers = #tpu.dot_dimension_numbers<[1], [1], [0], [0], [0, 0, 1, 0], [], []>} : vector<8x8xf32>, vector<16x8xf32>, vector<8x16xf32> -> vector<8x16xf32>
    %cst_6 = arith.constant dense<0xFF800000> : vector<8xf32>
    %15 = vector.multi_reduction <maximumf>, %14, %cst_6 [1] : vector<8x16xf32> to vector<8xf32>
    %16 = vector.shape_cast %15 : vector<8xf32> to vector<8x1xf32>
    %17 = vector.broadcast %16 : vector<8x1xf32> to vector<8x16xf32>
    %18 = arith.subf %14, %17 : vector<8x16xf32>
    %19 = math.exp %18 : vector<8x16xf32>
    %cst_7 = arith.constant dense<0.000000e+00> : vector<8xf32>
    %20 = vector.multi_reduction <add>, %19, %cst_7 [1] : vector<8x16xf32> to vector<8xf32>
    %21 = vector.shape_cast %20 : vector<8xf32> to vector<8x1xf32>
    %22 = vector.broadcast %21 : vector<8x1xf32> to vector<8x16xf32>
    %23 = arith.divf %19, %22 : vector<8x16xf32>
    %24 = vector.extract_strided_slice %11 {offsets = [0, 0], sizes = [16, 8], strides = [1, 1]} : vector<16x32xf32> to vector<16x8xf32>
    %cst_8 = arith.constant dense<0.000000e+00> : vector<8x8xf32>
    %25 = tpu.matmul %23, %24, %cst_8 {dimension_numbers = #tpu.dot_dimension_numbers<[1], [0], [0], [1], [0, 0, 1, 1], [], []>} : vector<8x16xf32>, vector<16x8xf32>, vector<8x8xf32> -> vector<8x8xf32>
    %c0_9 = arith.constant 0 : index
    %c0_10 = arith.constant 0 : index
    %26 = vector.load %arg4[%c0_9, %c0_10] : memref<16x32xf32, #tpu.memory_space<vmem>>, vector<8x8xf32>
    tpu.vector_store %arg4[%c0_9, %c0_10], %25 {strides = array<i32>} : memref<16x32xf32, #tpu.memory_space<vmem>>, vector<8x8xf32>,
    %27 = vector.extract_strided_slice %9 {offsets = [0, 8], sizes = [8, 8], strides = [1, 1]} : vector<8x32xf32> to vector<8x8xf32>
    %28 = vector.extract_strided_slice %10 {offsets = [0, 8], sizes = [16, 8], strides = [1, 1]} : vector<16x32xf32> to vector<16x8xf32>
    %cst_11 = arith.constant dense<0.000000e+00> : vector<8x16xf32>
    %29 = tpu.matmul %27, %28, %cst_11 {dimension_numbers = #tpu.dot_dimension_numbers<[1], [1], [0], [0], [0, 0, 1, 0], [], []>} : vector<8x8xf32>, vector<16x8xf32>, vector<8x16xf32> -> vector<8x16xf32>
    %cst_12 = arith.constant dense<0xFF800000> : vector<8xf32>
    %30 = vector.multi_reduction <maximumf>, %29, %cst_12 [1] : vector<8x16xf32> to vector<8xf32>
    %31 = vector.shape_cast %30 : vector<8xf32> to vector<8x1xf32>
    %32 = vector.broadcast %31 : vector<8x1xf32> to vector<8x16xf32>
    %33 = arith.subf %29, %32 : vector<8x16xf32>
    %34 = math.exp %33 : vector<8x16xf32>
    %cst_13 = arith.constant dense<0.000000e+00> : vector<8xf32>
    %35 = vector.multi_reduction <add>, %34, %cst_13 [1] : vector<8x16xf32> to vector<8xf32>
    %36 = vector.shape_cast %35 : vector<8xf32> to vector<8x1xf32>
    %37 = vector.broadcast %36 : vector<8x1xf32> to vector<8x16xf32>
    %38 = arith.divf %34, %37 : vector<8x16xf32>
    %39 = vector.extract_strided_slice %11 {offsets = [0, 8], sizes = [16, 8], strides = [1, 1]} : vector<16x32xf32> to vector<16x8xf32>
    %cst_14 = arith.constant dense<0.000000e+00> : vector<8x8xf32>
    %40 = tpu.matmul %38, %39, %cst_14 {dimension_numbers = #tpu.dot_dimension_numbers<[1], [0], [0], [1], [0, 0, 1, 1], [], []>} : vector<8x16xf32>, vector<16x8xf32>, vector<8x8xf32> -> vector<8x8xf32>
    %c0_15 = arith.constant 0 : index
    %c8 = arith.constant 8 : index
    %41 = vector.load %arg4[%c0_15, %c8] : memref<16x32xf32, #tpu.memory_space<vmem>>, vector<8x8xf32>
    tpu.vector_store %arg4[%c0_15, %c8], %40 {strides = array<i32>} : memref<16x32xf32, #tpu.memory_space<vmem>>, vector<8x8xf32>,
    %42 = vector.extract_strided_slice %9 {offsets = [0, 16], sizes = [8, 8], strides = [1, 1]} : vector<8x32xf32> to vector<8x8xf32>
    %43 = vector.extract_strided_slice %10 {offsets = [0, 16], sizes = [16, 8], strides = [1, 1]} : vector<16x32xf32> to vector<16x8xf32>
    %cst_16 = arith.constant dense<0.000000e+00> : vector<8x16xf32>
    %44 = tpu.matmul %42, %43, %cst_16 {dimension_numbers = #tpu.dot_dimension_numbers<[1], [1], [0], [0], [0, 0, 1, 0], [], []>} : vector<8x8xf32>, vector<16x8xf32>, vector<8x16xf32> -> vector<8x16xf32>
    %cst_17 = arith.constant dense<0xFF800000> : vector<8xf32>
    %45 = vector.multi_reduction <maximumf>, %44, %cst_17 [1] : vector<8x16xf32> to vector<8xf32>
    %46 = vector.shape_cast %45 : vector<8xf32> to vector<8x1xf32>
    %47 = vector.broadcast %46 : vector<8x1xf32> to vector<8x16xf32>
    %48 = arith.subf %44, %47 : vector<8x16xf32>
    %49 = math.exp %48 : vector<8x16xf32>
    %cst_18 = arith.constant dense<0.000000e+00> : vector<8xf32>
    %50 = vector.multi_reduction <add>, %49, %cst_18 [1] : vector<8x16xf32> to vector<8xf32>
    %51 = vector.shape_cast %50 : vector<8xf32> to vector<8x1xf32>
    %52 = vector.broadcast %51 : vector<8x1xf32> to vector<8x16xf32>
    %53 = arith.divf %49, %52 : vector<8x16xf32>
    %54 = vector.extract_strided_slice %11 {offsets = [0, 16], sizes = [16, 8], strides = [1, 1]} : vector<16x32xf32> to vector<16x8xf32>
    %cst_19 = arith.constant dense<0.000000e+00> : vector<8x8xf32>
    %55 = tpu.matmul %53, %54, %cst_19 {dimension_numbers = #tpu.dot_dimension_numbers<[1], [0], [0], [1], [0, 0, 1, 1], [], []>} : vector<8x16xf32>, vector<16x8xf32>, vector<8x8xf32> -> vector<8x8xf32>
    %c0_20 = arith.constant 0 : index
    %c16 = arith.constant 16 : index
    %56 = vector.load %arg4[%c0_20, %c16] : memref<16x32xf32, #tpu.memory_space<vmem>>, vector<8x8xf32>
    tpu.vector_store %arg4[%c0_20, %c16], %55 {strides = array<i32>} : memref<16x32xf32, #tpu.memory_space<vmem>>, vector<8x8xf32>,
    %57 = vector.extract_strided_slice %9 {offsets = [0, 24], sizes = [8, 8], strides = [1, 1]} : vector<8x32xf32> to vector<8x8xf32>
    %58 = vector.extract_strided_slice %10 {offsets = [0, 24], sizes = [16, 8], strides = [1, 1]} : vector<16x32xf32> to vector<16x8xf32>
    %cst_21 = arith.constant dense<0.000000e+00> : vector<8x16xf32>
    %59 = tpu.matmul %57, %58, %cst_21 {dimension_numbers = #tpu.dot_dimension_numbers<[1], [1], [0], [0], [0, 0, 1, 0], [], []>} : vector<8x8xf32>, vector<16x8xf32>, vector<8x16xf32> -> vector<8x16xf32>
    %cst_22 = arith.constant dense<0xFF800000> : vector<8xf32>
    %60 = vector.multi_reduction <maximumf>, %59, %cst_22 [1] : vector<8x16xf32> to vector<8xf32>
    %61 = vector.shape_cast %60 : vector<8xf32> to vector<8x1xf32>
    %62 = vector.broadcast %61 : vector<8x1xf32> to vector<8x16xf32>
    %63 = arith.subf %59, %62 : vector<8x16xf32>
    %64 = math.exp %63 : vector<8x16xf32>
    %cst_23 = arith.constant dense<0.000000e+00> : vector<8xf32>
    %65 = vector.multi_reduction <add>, %64, %cst_23 [1] : vector<8x16xf32> to vector<8xf32>
    %66 = vector.shape_cast %65 : vector<8xf32> to vector<8x1xf32>
    %67 = vector.broadcast %66 : vector<8x1xf32> to vector<8x16xf32>
    %68 = arith.divf %64, %67 : vector<8x16xf32>
    %69 = vector.extract_strided_slice %11 {offsets = [0, 24], sizes = [16, 8], strides = [1, 1]} : vector<16x32xf32> to vector<16x8xf32>
    %cst_24 = arith.constant dense<0.000000e+00> : vector<8x8xf32>
    %70 = tpu.matmul %68, %69, %cst_24 {dimension_numbers = #tpu.dot_dimension_numbers<[1], [0], [0], [1], [0, 0, 1, 1], [], []>} : vector<8x16xf32>, vector<16x8xf32>, vector<8x8xf32> -> vector<8x8xf32>
    %c0_25 = arith.constant 0 : index
    %c24 = arith.constant 24 : index
    %71 = vector.load %arg4[%c0_25, %c24] : memref<16x32xf32, #tpu.memory_space<vmem>>, vector<8x8xf32>
    tpu.vector_store %arg4[%c0_25, %c24], %70 {strides = array<i32>} : memref<16x32xf32, #tpu.memory_space<vmem>>, vector<8x8xf32>,
    %72 = vector.extract_strided_slice %6 {offsets = [8, 0], sizes = [8, 32], strides = [1, 1]} : vector<16x32xf32> to vector<8x32xf32>
    %73 = vector.extract_strided_slice %7 {offsets = [16, 0], sizes = [16, 32], strides = [1, 1]} : vector<32x32xf32> to vector<16x32xf32>
    %74 = vector.extract_strided_slice %8 {offsets = [16, 0], sizes = [16, 32], strides = [1, 1]} : vector<32x32xf32> to vector<16x32xf32>
    %75 = vector.extract_strided_slice %72 {offsets = [0, 0], sizes = [8, 8], strides = [1, 1]} : vector<8x32xf32> to vector<8x8xf32>
    %76 = vector.extract_strided_slice %73 {offsets = [0, 0], sizes = [16, 8], strides = [1, 1]} : vector<16x32xf32> to vector<16x8xf32>
    %cst_26 = arith.constant dense<0.000000e+00> : vector<8x16xf32>
    %77 = tpu.matmul %75, %76, %cst_26 {dimension_numbers = #tpu.dot_dimension_numbers<[1], [1], [0], [0], [0, 0, 1, 0], [], []>} : vector<8x8xf32>, vector<16x8xf32>, vector<8x16xf32> -> vector<8x16xf32>
    %cst_27 = arith.constant dense<0xFF800000> : vector<8xf32>
    %78 = vector.multi_reduction <maximumf>, %77, %cst_27 [1] : vector<8x16xf32> to vector<8xf32>
    %79 = vector.shape_cast %78 : vector<8xf32> to vector<8x1xf32>
    %80 = vector.broadcast %79 : vector<8x1xf32> to vector<8x16xf32>
    %81 = arith.subf %77, %80 : vector<8x16xf32>
    %82 = math.exp %81 : vector<8x16xf32>
    %cst_28 = arith.constant dense<0.000000e+00> : vector<8xf32>
    %83 = vector.multi_reduction <add>, %82, %cst_28 [1] : vector<8x16xf32> to vector<8xf32>
    %84 = vector.shape_cast %83 : vector<8xf32> to vector<8x1xf32>
    %85 = vector.broadcast %84 : vector<8x1xf32> to vector<8x16xf32>
    %86 = arith.divf %82, %85 : vector<8x16xf32>
    %87 = vector.extract_strided_slice %74 {offsets = [0, 0], sizes = [16, 8], strides = [1, 1]} : vector<16x32xf32> to vector<16x8xf32>
    %cst_29 = arith.constant dense<0.000000e+00> : vector<8x8xf32>
    %88 = tpu.matmul %86, %87, %cst_29 {dimension_numbers = #tpu.dot_dimension_numbers<[1], [0], [0], [1], [0, 0, 1, 1], [], []>} : vector<8x16xf32>, vector<16x8xf32>, vector<8x8xf32> -> vector<8x8xf32>
    %c8_30 = arith.constant 8 : index
    %c0_31 = arith.constant 0 : index
    %89 = vector.load %arg4[%c8_30, %c0_31] : memref<16x32xf32, #tpu.memory_space<vmem>>, vector<8x8xf32>
    tpu.vector_store %arg4[%c8_30, %c0_31], %88 {strides = array<i32>} : memref<16x32xf32, #tpu.memory_space<vmem>>, vector<8x8xf32>,
    %90 = vector.extract_strided_slice %72 {offsets = [0, 8], sizes = [8, 8], strides = [1, 1]} : vector<8x32xf32> to vector<8x8xf32>
    %91 = vector.extract_strided_slice %73 {offsets = [0, 8], sizes = [16, 8], strides = [1, 1]} : vector<16x32xf32> to vector<16x8xf32>
    %cst_32 = arith.constant dense<0.000000e+00> : vector<8x16xf32>
    %92 = tpu.matmul %90, %91, %cst_32 {dimension_numbers = #tpu.dot_dimension_numbers<[1], [1], [0], [0], [0, 0, 1, 0], [], []>} : vector<8x8xf32>, vector<16x8xf32>, vector<8x16xf32> -> vector<8x16xf32>
    %cst_33 = arith.constant dense<0xFF800000> : vector<8xf32>
    %93 = vector.multi_reduction <maximumf>, %92, %cst_33 [1] : vector<8x16xf32> to vector<8xf32>
    %94 = vector.shape_cast %93 : vector<8xf32> to vector<8x1xf32>
    %95 = vector.broadcast %94 : vector<8x1xf32> to vector<8x16xf32>
    %96 = arith.subf %92, %95 : vector<8x16xf32>
    %97 = math.exp %96 : vector<8x16xf32>
    %cst_34 = arith.constant dense<0.000000e+00> : vector<8xf32>
    %98 = vector.multi_reduction <add>, %97, %cst_34 [1] : vector<8x16xf32> to vector<8xf32>
    %99 = vector.shape_cast %98 : vector<8xf32> to vector<8x1xf32>
    %100 = vector.broadcast %99 : vector<8x1xf32> to vector<8x16xf32>
    %101 = arith.divf %97, %100 : vector<8x16xf32>
    %102 = vector.extract_strided_slice %74 {offsets = [0, 8], sizes = [16, 8], strides = [1, 1]} : vector<16x32xf32> to vector<16x8xf32>
    %cst_35 = arith.constant dense<0.000000e+00> : vector<8x8xf32>
    %103 = tpu.matmul %101, %102, %cst_35 {dimension_numbers = #tpu.dot_dimension_numbers<[1], [0], [0], [1], [0, 0, 1, 1], [], []>} : vector<8x16xf32>, vector<16x8xf32>, vector<8x8xf32> -> vector<8x8xf32>
    %c8_36 = arith.constant 8 : index
    %c8_37 = arith.constant 8 : index
    %104 = vector.load %arg4[%c8_36, %c8_37] : memref<16x32xf32, #tpu.memory_space<vmem>>, vector<8x8xf32>
    tpu.vector_store %arg4[%c8_36, %c8_37], %103 {strides = array<i32>} : memref<16x32xf32, #tpu.memory_space<vmem>>, vector<8x8xf32>,
    %105 = vector.extract_strided_slice %72 {offsets = [0, 16], sizes = [8, 8], strides = [1, 1]} : vector<8x32xf32> to vector<8x8xf32>
    %106 = vector.extract_strided_slice %73 {offsets = [0, 16], sizes = [16, 8], strides = [1, 1]} : vector<16x32xf32> to vector<16x8xf32>
    %cst_38 = arith.constant dense<0.000000e+00> : vector<8x16xf32>
    %107 = tpu.matmul %105, %106, %cst_38 {dimension_numbers = #tpu.dot_dimension_numbers<[1], [1], [0], [0], [0, 0, 1, 0], [], []>} : vector<8x8xf32>, vector<16x8xf32>, vector<8x16xf32> -> vector<8x16xf32>
    %cst_39 = arith.constant dense<0xFF800000> : vector<8xf32>
    %108 = vector.multi_reduction <maximumf>, %107, %cst_39 [1] : vector<8x16xf32> to vector<8xf32>
    %109 = vector.shape_cast %108 : vector<8xf32> to vector<8x1xf32>
    %110 = vector.broadcast %109 : vector<8x1xf32> to vector<8x16xf32>
    %111 = arith.subf %107, %110 : vector<8x16xf32>
    %112 = math.exp %111 : vector<8x16xf32>
    %cst_40 = arith.constant dense<0.000000e+00> : vector<8xf32>
    %113 = vector.multi_reduction <add>, %112, %cst_40 [1] : vector<8x16xf32> to vector<8xf32>
    %114 = vector.shape_cast %113 : vector<8xf32> to vector<8x1xf32>
    %115 = vector.broadcast %114 : vector<8x1xf32> to vector<8x16xf32>
    %116 = arith.divf %112, %115 : vector<8x16xf32>
    %117 = vector.extract_strided_slice %74 {offsets = [0, 16], sizes = [16, 8], strides = [1, 1]} : vector<16x32xf32> to vector<16x8xf32>
    %cst_41 = arith.constant dense<0.000000e+00> : vector<8x8xf32>
    %118 = tpu.matmul %116, %117, %cst_41 {dimension_numbers = #tpu.dot_dimension_numbers<[1], [0], [0], [1], [0, 0, 1, 1], [], []>} : vector<8x16xf32>, vector<16x8xf32>, vector<8x8xf32> -> vector<8x8xf32>
    %c8_42 = arith.constant 8 : index
    %c16_43 = arith.constant 16 : index
    %119 = vector.load %arg4[%c8_42, %c16_43] : memref<16x32xf32, #tpu.memory_space<vmem>>, vector<8x8xf32>
    tpu.vector_store %arg4[%c8_42, %c16_43], %118 {strides = array<i32>} : memref<16x32xf32, #tpu.memory_space<vmem>>, vector<8x8xf32>,
    %120 = vector.extract_strided_slice %72 {offsets = [0, 24], sizes = [8, 8], strides = [1, 1]} : vector<8x32xf32> to vector<8x8xf32>
    %121 = vector.extract_strided_slice %73 {offsets = [0, 24], sizes = [16, 8], strides = [1, 1]} : vector<16x32xf32> to vector<16x8xf32>
    %cst_44 = arith.constant dense<0.000000e+00> : vector<8x16xf32>
    %122 = tpu.matmul %120, %121, %cst_44 {dimension_numbers = #tpu.dot_dimension_numbers<[1], [1], [0], [0], [0, 0, 1, 0], [], []>} : vector<8x8xf32>, vector<16x8xf32>, vector<8x16xf32> -> vector<8x16xf32>
    %cst_45 = arith.constant dense<0xFF800000> : vector<8xf32>
    %123 = vector.multi_reduction <maximumf>, %122, %cst_45 [1] : vector<8x16xf32> to vector<8xf32>
    %124 = vector.shape_cast %123 : vector<8xf32> to vector<8x1xf32>
    %125 = vector.broadcast %124 : vector<8x1xf32> to vector<8x16xf32>
    %126 = arith.subf %122, %125 : vector<8x16xf32>
    %127 = math.exp %126 : vector<8x16xf32>
    %cst_46 = arith.constant dense<0.000000e+00> : vector<8xf32>
    %128 = vector.multi_reduction <add>, %127, %cst_46 [1] : vector<8x16xf32> to vector<8xf32>
    %129 = vector.shape_cast %128 : vector<8xf32> to vector<8x1xf32>
    %130 = vector.broadcast %129 : vector<8x1xf32> to vector<8x16xf32>
    %131 = arith.divf %127, %130 : vector<8x16xf32>
    %132 = vector.extract_strided_slice %74 {offsets = [0, 24], sizes = [16, 8], strides = [1, 1]} : vector<16x32xf32> to vector<16x8xf32>
    %cst_47 = arith.constant dense<0.000000e+00> : vector<8x8xf32>
    %133 = tpu.matmul %131, %132, %cst_47 {dimension_numbers = #tpu.dot_dimension_numbers<[1], [0], [0], [1], [0, 0, 1, 1], [], []>} : vector<8x16xf32>, vector<16x8xf32>, vector<8x8xf32> -> vector<8x8xf32>
    %c8_48 = arith.constant 8 : index
    %c24_49 = arith.constant 24 : index
    %134 = vector.load %arg4[%c8_48, %c24_49] : memref<16x32xf32, #tpu.memory_space<vmem>>, vector<8x8xf32>
    tpu.vector_store %arg4[%c8_48, %c24_49], %133 {strides = array<i32>} : memref<16x32xf32, #tpu.memory_space<vmem>>, vector<8x8xf32>,
    %c0_50 = arith.constant 0 : index
    %c0_51 = arith.constant 0 : index
    %135 = vector.load %arg4[%c0_50, %c0_51] : memref<16x32xf32, #tpu.memory_space<vmem>>, vector<16x32xf32>
    %c0_52 = arith.constant 0 : index
    %c96 = arith.constant 96 : index
    %136 = vector.load %arg1[%c0_52, %c96] : memref<32x256xf32, #tpu.memory_space<vmem>>, vector<32x32xf32>
    %cst_53 = arith.constant dense<0.000000e+00> : vector<16x32xf32>
    %137 = tpu.matmul %135, %136, %cst_53 {dimension_numbers = #tpu.dot_dimension_numbers<[1], [0], [0], [1], [0, 0, 1, 1], [], []>} : vector<16x32xf32>, vector<32x32xf32>, vector<16x32xf32> -> vector<16x32xf32>
    %c1 = arith.constant 1 : index
    %c0_54 = arith.constant 0 : index
    %138 = vector.load %arg2[%c1, %c0_54] : memref<8x128xf32, #tpu.memory_space<vmem>>, vector<1x32xf32>
    %139 = vector.broadcast %138 : vector<1x32xf32> to vector<16x32xf32>
    %140 = arith.addf %137, %139 : vector<16x32xf32>
    %141 = vector.extract_strided_slice %0 {offsets = [0, 0], sizes = [16, 32], strides = [1, 1]} : vector<48x32xf32> to vector<16x32xf32>
    %142 = arith.addf %141, %140 : vector<16x32xf32>
    %c4 = arith.constant 4 : index
    %c0_55 = arith.constant 0 : index
    %143 = vector.load %arg2[%c4, %c0_55] : memref<8x128xf32, #tpu.memory_space<vmem>>, vector<1x32xf32>
    %c5 = arith.constant 5 : index
    %c0_56 = arith.constant 0 : index
    %144 = vector.load %arg2[%c5, %c0_56] : memref<8x128xf32, #tpu.memory_space<vmem>>, vector<1x32xf32>
    %cst_57 = arith.constant dense<0.000000e+00> : vector<16xf32>
    %145 = vector.multi_reduction <add>, %142, %cst_57 [1] : vector<16x32xf32> to vector<16xf32>
    %146 = vector.shape_cast %145 : vector<16xf32> to vector<16x1xf32>
    %cst_58 = arith.constant 3.200000e+01 : f32
    %147 = vector.broadcast %cst_58 : f32 to vector<16x1xf32>
    %148 = arith.divf %146, %147 : vector<16x1xf32>
    %149 = vector.broadcast %148 : vector<16x1xf32> to vector<16x32xf32>
    %150 = arith.subf %142, %149 : vector<16x32xf32>
    %151 = arith.mulf %150, %150 : vector<16x32xf32>
    %cst_59 = arith.constant dense<0.000000e+00> : vector<16xf32>
    %152 = vector.multi_reduction <add>, %151, %cst_59 [1] : vector<16x32xf32> to vector<16xf32>
    %153 = vector.shape_cast %152 : vector<16xf32> to vector<16x1xf32>
    %cst_60 = arith.constant 3.200000e+01 : f32
    %154 = vector.broadcast %cst_60 : f32 to vector<16x1xf32>
    %155 = arith.divf %153, %154 : vector<16x1xf32>
    %cst_61 = arith.constant 9.99999974E-6 : f32
    %156 = vector.broadcast %cst_61 : f32 to vector<16x1xf32>
    %157 = arith.addf %155, %156 : vector<16x1xf32>
    %158 = math.rsqrt %157 : vector<16x1xf32>
    %159 = vector.broadcast %158 : vector<16x1xf32> to vector<16x32xf32>
    %160 = arith.mulf %150, %159 : vector<16x32xf32>
    %161 = vector.broadcast %143 : vector<1x32xf32> to vector<16x32xf32>
    %162 = arith.mulf %160, %161 : vector<16x32xf32>
    %163 = vector.broadcast %144 : vector<1x32xf32> to vector<16x32xf32>
    %164 = arith.addf %162, %163 : vector<16x32xf32>
    %c0_62 = arith.constant 0 : index
    %c128 = arith.constant 128 : index
    %165 = vector.load %arg1[%c0_62, %c128] : memref<32x256xf32, #tpu.memory_space<vmem>>, vector<32x64xf32>
    %cst_63 = arith.constant dense<0.000000e+00> : vector<16x64xf32>
    %166 = tpu.matmul %164, %165, %cst_63 {dimension_numbers = #tpu.dot_dimension_numbers<[1], [0], [0], [1], [0, 0, 1, 1], [], []>} : vector<16x32xf32>, vector<32x64xf32>, vector<16x64xf32> -> vector<16x64xf32>
    %c2 = arith.constant 2 : index
    %c0_64 = arith.constant 0 : index
    %167 = vector.load %arg2[%c2, %c0_64] : memref<8x128xf32, #tpu.memory_space<vmem>>, vector<1x64xf32>
    %168 = vector.broadcast %167 : vector<1x64xf32> to vector<16x64xf32>
    %169 = arith.addf %166, %168 : vector<16x64xf32>
    %cst_65 = arith.constant 0.000000e+00 : f32
    %170 = vector.broadcast %cst_65 : f32 to vector<16x64xf32>
    %171 = arith.maximumf %169, %170 : vector<16x64xf32>
    %c0_66 = arith.constant 0 : index
    %c192 = arith.constant 192 : index
    %172 = vector.load %arg1[%c0_66, %c192] : memref<32x256xf32, #tpu.memory_space<vmem>>, vector<32x64xf32>
    %cst_67 = arith.constant dense<0.000000e+00> : vector<16x32xf32>
    %173 = tpu.matmul %171, %172, %cst_67 {dimension_numbers = #tpu.dot_dimension_numbers<[1], [1], [0], [0], [0, 0, 1, 0], [], []>} : vector<16x64xf32>, vector<32x64xf32>, vector<16x32xf32> -> vector<16x32xf32>
    %c3 = arith.constant 3 : index
    %c0_68 = arith.constant 0 : index
    %174 = vector.load %arg2[%c3, %c0_68] : memref<8x128xf32, #tpu.memory_space<vmem>>, vector<1x32xf32>
    %175 = vector.broadcast %174 : vector<1x32xf32> to vector<16x32xf32>
    %176 = arith.addf %173, %175 : vector<16x32xf32>
    %177 = arith.addf %164, %176 : vector<16x32xf32>
    %c6 = arith.constant 6 : index
    %c0_69 = arith.constant 0 : index
    %178 = vector.load %arg2[%c6, %c0_69] : memref<8x128xf32, #tpu.memory_space<vmem>>, vector<1x32xf32>
    %c7 = arith.constant 7 : index
    %c0_70 = arith.constant 0 : index
    %179 = vector.load %arg2[%c7, %c0_70] : memref<8x128xf32, #tpu.memory_space<vmem>>, vector<1x32xf32>
    %cst_71 = arith.constant dense<0.000000e+00> : vector<16xf32>
    %180 = vector.multi_reduction <add>, %177, %cst_71 [1] : vector<16x32xf32> to vector<16xf32>
    %181 = vector.shape_cast %180 : vector<16xf32> to vector<16x1xf32>
    %cst_72 = arith.constant 3.200000e+01 : f32
    %182 = vector.broadcast %cst_72 : f32 to vector<16x1xf32>
    %183 = arith.divf %181, %182 : vector<16x1xf32>
    %184 = vector.broadcast %183 : vector<16x1xf32> to vector<16x32xf32>
    %185 = arith.subf %177, %184 : vector<16x32xf32>
    %186 = arith.mulf %185, %185 : vector<16x32xf32>
    %cst_73 = arith.constant dense<0.000000e+00> : vector<16xf32>
    %187 = vector.multi_reduction <add>, %186, %cst_73 [1] : vector<16x32xf32> to vector<16xf32>
    %188 = vector.shape_cast %187 : vector<16xf32> to vector<16x1xf32>
    %cst_74 = arith.constant 3.200000e+01 : f32
    %189 = vector.broadcast %cst_74 : f32 to vector<16x1xf32>
    %190 = arith.divf %188, %189 : vector<16x1xf32>
    %cst_75 = arith.constant 9.99999974E-6 : f32
    %191 = vector.broadcast %cst_75 : f32 to vector<16x1xf32>
    %192 = arith.addf %190, %191 : vector<16x1xf32>
    %193 = math.rsqrt %192 : vector<16x1xf32>
    %194 = vector.broadcast %193 : vector<16x1xf32> to vector<16x32xf32>
    %195 = arith.mulf %185, %194 : vector<16x32xf32>
    %196 = vector.broadcast %178 : vector<1x32xf32> to vector<16x32xf32>
    %197 = arith.mulf %195, %196 : vector<16x32xf32>
    %198 = vector.broadcast %179 : vector<1x32xf32> to vector<16x32xf32>
    %199 = arith.addf %197, %198 : vector<16x32xf32>
    %c0_76 = arith.constant 0 : index
    %c0_77 = arith.constant 0 : index
    %200 = vector.load %arg3[%c0_76, %c0_77] : memref<16x32xf32, #tpu.memory_space<vmem>>, vector<16x32xf32>
    tpu.vector_store %arg3[%c0_76, %c0_77], %199 {strides = array<i32>} : memref<16x32xf32, #tpu.memory_space<vmem>>, vector<16x32xf32>,
    return
  }
}

</mosaic_0001>

<llo_original>
// kernel: transformer_pallas.1
$region0: #{transformer_pallas.1}
  #allocation0 [shape = 'u32[]', space=smem, size = 0x4, offset = 0x4, fixed_abs, tag = 'smem constant byte address 0x4 - core index']
  #allocation1 [shape = 'u32[144,128]{1,0:T(1,128)}', space=vmem, size = 0x12000, scoped, tag = 'internal scratch']
  #allocation2 [shape = 'f32[16,32]{1,0:T(8,128)}', space=vmem, size = 0x2000, scoped, tag = 'scratch operand']
  %s0 = inlined_call_operand.vmem [shape: f32[48,32], index: 0, kind: input, shape index: {}]
  %s1 = inlined_call_operand.vmem [shape: f32[32,256], index: 1, kind: input, shape index: {}]
  %s2 = inlined_call_operand.vmem [shape: f32[8,128], index: 2, kind: input, shape index: {}]
  %s3 = inlined_call_operand.vmem [shape: f32[16,32], index: 3, kind: output, shape index: {}]
  %s4 = sld [smem:[#allocation0]]
  $region22: #{transformer_pallas.1} parent=0
    _
  %s6 = ssub.s32 1, %s4
  %s7 = scalar_select 0, %s6, %s4
  // Predicated region
  $region2: #{transformer_pallas.1} parent=0 // pred_check
    _
  $region3: #{transformer_pallas.1} parent=0 // pred_check_branch
    %9 = sbr.rel (0) target = $region5
  $region4: #{transformer_pallas.1} parent=0 // pred_region
    _
  $region5: #{transformer_pallas.1} parent=0 // pred_fallthru
    _
  // Predicated region
  $region6: #{transformer_pallas.1} parent=0 // pred_check
    _
  $region7: #{transformer_pallas.1} parent=0 // pred_check_branch
    %11 = sbr.rel (0) target = $region9
  $region8: #{transformer_pallas.1} parent=0 // pred_region
    _
  $region9: #{transformer_pallas.1} parent=0 // pred_fallthru
    _
  // Predicated region
  $region10: #{transformer_pallas.1} parent=0 // pred_check
    _
  $region11: #{transformer_pallas.1} parent=0 // pred_check_branch
    %13 = sbr.rel (0) target = $region13
  $region12: #{transformer_pallas.1} parent=0 // pred_region
    _
  $region13: #{transformer_pallas.1} parent=0 // pred_fallthru
    _
  %v14 = vld [vmem:[%s0] sm:$0xff]
  %v15 = vld [vmem:[%s0 + $0x8] sm:$0xff]
  %v16 = vld [vmem:[%s0 + $0x10] sm:$0xff]
  %v17 = vld [vmem:[%s0 + $0x18] sm:$0xff]
  %v18 = vld [vmem:[%s0 + $0x20] sm:$0xff]
  %v19 = vld [vmem:[%s0 + $0x28] sm:$0xff]
  %v20 = vld [vmem:[%s1] sm:$0xff]
  %v21 = vld [vmem:[%s1 + $0x10] sm:$0xff]
  %v22 = vld [vmem:[%s1 + $0x20] sm:$0xff]
  %v23 = vld [vmem:[%s1 + $0x30] sm:$0xff]
  %v24 = vld [vmem:[%s2] sm:$0x1]
  %v25 = vlaneseq
  %v26 = vshrl.u32 %v25, 7
  %v27 = vsub.s32 0, %v26
  %v28 = vrot.slane %v24, %v27
  %vm29 = vcmask 261120
  %v31 = vsel %vm29, %v14, 0
  %v34 = vsel %vm29, %v15, 0
  %v37 = vsel %vm29, %v16, 0
  %v40 = vsel %vm29, %v17, 0
  %v43 = vsel %vm29, %v18, 0
  %v46 = vsel %vm29, %v19, 0
  %48 = vmatprep.subr.mxu0 0.0
  %49 = vmatpush1.msra.mxu0 0.0
  %50 = vmatprep.subr.mxu0 0.0
  %51 = vmatpush1.msra.mxu0 0.0
  %52 = vmatprep.subr.mxu0 0.0
  %53 = vmatpush1.msra.mxu0 0.0
  %54 = vmatprep.subr.mxu0 0.0
  %55 = vmatpush1.msra.mxu0 0.0
  %56 = vmatprep.subr.mxu0 0.0
  %57 = vmatpush1.msra.mxu0 0.0
  %58 = vmatprep.subr.mxu0 0.0
  %59 = vmatpush1.msra.mxu0 0.0
  %60 = vmatprep.subr.mxu0 0.0
  %61 = vmatpush1.msra.mxu0 0.0
  %62 = vmatprep.subr.mxu0 0.0
  %63 = vmatpush1.msra.mxu0 0.0
  %64 = vmatprep.subr.mxu0 0.0
  %65 = vmatpush1.msra.mxu0 0.0
  %66 = vmatprep.subr.mxu0 0.0
  %67 = vmatpush1.msra.mxu0 0.0
  %68 = vmatprep.subr.mxu0 0.0
  %69 = vmatpush1.msra.mxu0 0.0
  %70 = vmatprep.subr.mxu0 0.0
  %71 = vmatpush1.msra.mxu0 0.0
  %72 = vmatprep.subr.mxu0 0.0
  %73 = vmatpush1.msra.mxu0 %v23
  %74 = vmatprep.subr.mxu0 0.0
  %75 = vmatpush1.msra.mxu0 %v22
  %76 = vmatprep.subr.mxu0 0.0
  %77 = vmatpush1.msra.mxu0 %v21
  %78 = vmatprep.subr.mxu0 0.0
  %79 = vmatpush1.msra.mxu0 %v20
  %80 = vmatprep.subr.mxu0 0.0
  %81 = vmatpush2.msra.mxu0 0.0
  %82 = vmatprep.subr.mxu0 0.0
  %83 = vmatpush2.msra.mxu0 0.0
  %84 = vmatprep.subr.mxu0 0.0
  %85 = vmatpush2.msra.mxu0 0.0
  %86 = vmatprep.subr.mxu0 0.0
  %87 = vmatpush2.msra.mxu0 0.0
  %88 = vmatprep.subr.mxu0 0.0
  %89 = vmatpush2.msra.mxu0 0.0
  %90 = vmatprep.subr.mxu0 0.0
  %91 = vmatpush2.msra.mxu0 0.0
  %92 = vmatprep.subr.mxu0 0.0
  %93 = vmatpush2.msra.mxu0 0.0
  %94 = vmatprep.subr.mxu0 0.0
  %95 = vmatpush2.msra.mxu0 0.0
  %96 = vmatprep.subr.mxu0 0.0
  %97 = vmatpush2.msra.mxu0 0.0
  %98 = vmatprep.subr.mxu0 0.0
  %99 = vmatpush2.msra.mxu0 0.0
  %100 = vmatprep.subr.mxu0 0.0
  %101 = vmatpush2.msra.mxu0 0.0
  %102 = vmatprep.subr.mxu0 0.0
  %103 = vmatpush2.msra.mxu0 0.0
  %104 = vmatprep.subr.mxu0 0.0
  %105 = vmatpush2.msra.mxu0 0.0
  %106 = vmatprep.subr.mxu0 0.0
  %107 = vmatpush2.msra.mxu0 0.0
  %108 = vmatprep.subr.mxu0 0.0
  %109 = vmatpush2.msra.mxu0 0.0
  %110 = vmatprep.subr.mxu0 0.0
  %111 = vmatpush2.msra.mxu0 0.0
  %112 = vmatprep.mubr.f32.mxu0 0.0
  %113 = vmatmul.mubr.f32.gmra.mxu0 %v31
  %v114 = vpop.f32.mrf.mxu0
  %v115 = vadd.f32 %v28, %v114
  %v116 = vpop.f32.mrf.mxu0
  %117 = vmatprep.mubr.f32.mxu0 0.0
  %118 = vmatmul.mubr.f32.gmra.mxu0 %v34
  %v119 = vpop.f32.mrf.mxu0
  %v120 = vadd.f32 %v28, %v119
  %v121 = vpop.f32.mrf.mxu0
  %122 = vmatprep.mubr.f32.mxu0 0.0
  %123 = vmatmul.mubr.f32.gmra.mxu0 %v37
  %v124 = vpop.f32.mrf.mxu0
  %v125 = vadd.f32 %v28, %v124
  %v126 = vpop.f32.mrf.mxu0
  %127 = vmatprep.mubr.f32.mxu0 0.0
  %128 = vmatmul.mubr.f32.gmra.mxu0 %v40
  %v129 = vpop.f32.mrf.mxu0
  %v130 = vadd.f32 %v28, %v129
  %v131 = vpop.f32.mrf.mxu0
  %132 = vmatprep.mubr.f32.mxu0 0.0
  %133 = vmatmul.mubr.f32.gmra.mxu0 %v43
  %v134 = vpop.f32.mrf.mxu0
  %v135 = vadd.f32 %v28, %v134
  %v136 = vpop.f32.mrf.mxu0
  %137 = vmatprep.mubr.f32.mxu0 0.0
  %138 = vmatmul.mubr.f32.gmra.mxu0 %v46
  %v139 = vpop.f32.mrf.mxu0
  %v140 = vadd.f32 %v28, %v139
  %v141 = vpop.f32.mrf.mxu0
  %142 = vdwg.mxu0
  %145 = vrot.lane.b32.xlu0 %v125, 96
  %v146 = vpop.permute.xlu0 %145
  %147 = vrot.lane.b32.xlu0 %v130, 96
  %v148 = vpop.permute.xlu0 %147
  %vm149 = vcmask 64512
  %v151 = vsel %vm149, %v115, 0
  %v153 = vsel %vm149, %v146, 0
  %v155 = vsel %vm149, %v148, 0
  %157 = vmatprep.subr.mxu0 0.0
  %158 = vmatpush1.xpose.msra.mxu0 0.0
  %159 = vmatprep.subr.mxu0 0.0
  %160 = vmatpush1.xpose.msra.mxu0 0.0
  %161 = vmatprep.subr.mxu0 0.0
  %162 = vmatpush1.xpose.msra.mxu0 0.0
  %163 = vmatprep.subr.mxu0 0.0
  %164 = vmatpush1.xpose.msra.mxu0 0.0
  %165 = vmatprep.subr.mxu0 0.0
  %166 = vmatpush1.xpose.msra.mxu0 0.0
  %167 = vmatprep.subr.mxu0 0.0
  %168 = vmatpush1.xpose.msra.mxu0 0.0
  %169 = vmatprep.subr.mxu0 0.0
  %170 = vmatpush1.xpose.msra.mxu0 0.0
  %171 = vmatprep.subr.mxu0 0.0
  %172 = vmatpush1.xpose.msra.mxu0 0.0
  %173 = vmatprep.subr.mxu0 0.0
  %174 = vmatpush1.xpose.msra.mxu0 0.0
  %175 = vmatprep.subr.mxu0 0.0
  %176 = vmatpush1.xpose.msra.mxu0 0.0
  %177 = vmatprep.subr.mxu0 0.0
  %178 = vmatpush1.xpose.msra.mxu0 0.0
  %179 = vmatprep.subr.mxu0 0.0
  %180 = vmatpush1.xpose.msra.mxu0 0.0
  %181 = vmatprep.subr.mxu0 0.0
  %182 = vmatpush1.xpose.msra.mxu0 0.0
  %183 = vmatprep.subr.mxu0 0.0
  %184 = vmatpush1.xpose.msra.mxu0 0.0
  %185 = vmatprep.subr.mxu0 0.0
  %186 = vmatpush1.xpose.msra.mxu0 %v155
  %187 = vmatprep.subr.mxu0 0.0
  %188 = vmatpush1.xpose.msra.mxu0 %v153
  %189 = vmatprep.subr.mxu0 0.0
  %190 = vmatpush2.xpose.msra.mxu0 0.0
  %191 = vmatprep.subr.mxu0 0.0
  %192 = vmatpush2.xpose.msra.mxu0 0.0
  %193 = vmatprep.subr.mxu0 0.0
  %194 = vmatpush2.xpose.msra.mxu0 0.0
  %195 = vmatprep.subr.mxu0 0.0
  %196 = vmatpush2.xpose.msra.mxu0 0.0
  %197 = vmatprep.subr.mxu0 0.0
  %198 = vmatpush2.xpose.msra.mxu0 0.0
  %199 = vmatprep.subr.mxu0 0.0
  %200 = vmatpush2.xpose.msra.mxu0 0.0
  %201 = vmatprep.subr.mxu0 0.0
  %202 = vmatpush2.xpose.msra.mxu0 0.0
  %203 = vmatprep.subr.mxu0 0.0
  %204 = vmatpush2.xpose.msra.mxu0 0.0
  %205 = vmatprep.subr.mxu0 0.0
  %206 = vmatpush2.xpose.msra.mxu0 0.0
  %207 = vmatprep.subr.mxu0 0.0
  %208 = vmatpush2.xpose.msra.mxu0 0.0
  %209 = vmatprep.subr.mxu0 0.0
  %210 = vmatpush2.xpose.msra.mxu0 0.0
  %211 = vmatprep.subr.mxu0 0.0
  %212 = vmatpush2.xpose.msra.mxu0 0.0
  %213 = vmatprep.subr.mxu0 0.0
  %214 = vmatpush2.xpose.msra.mxu0 0.0
  %215 = vmatprep.subr.mxu0 0.0
  %216 = vmatpush2.xpose.msra.mxu0 0.0
  %217 = vmatprep.subr.mxu0 0.0
  %218 = vmatpush2.xpose.msra.mxu0 0.0
  %219 = vmatprep.subr.mxu0 0.0
  %220 = vmatpush2.xpose.msra.mxu0 0.0
  %221 = vmatprep.mubr.f32.mxu0 0.0
  %222 = vmatmul.mubr.f32.gmra.mxu0 %v151
  %v223 = vpop.f32.mrf.mxu0
  %v224 = vadd.f32 0.0, %v223
  %v225 = vpop.f32.mrf.mxu0
  %226 = vdwg.mxu0
  %vm227 = vcmask 130048
  %v228 = vsel %vm227, %v224, -inf
  %229 = vmax.xlane.f32.xlu0 %v228
  %v230 = vpop.xlane.xlu0 %229
  %v231 = vsub.f32 %v224, %v230
  %v232 = vmul.f32 %v231, 1.442695
  %v233 = vpow.pop %v232
  %v234 = vsel %vm227, %v233, 0.0
  %235 = vadd.xlane.f32.xlu0 %v234
  %v236 = vpop.xlane.xlu0 %235
  %v237 = vrcp.pop %v236
  %v238 = vmul.f32 %v233, %v237
  %239 = vrot.lane.b32.xlu0 %v125, 64
  %v240 = vpop.permute.xlu0 %239
  %241 = vrot.lane.b32.xlu0 %v130, 64
  %v242 = vpop.permute.xlu0 %241
  %v246 = vsel %vm227, %v238, 0
  %248 = vmatprep.subr.mxu0 0.0
  %249 = vmatpush1.msra.mxu0 0.0
  %250 = vmatprep.subr.mxu0 0.0
  %251 = vmatpush1.msra.mxu0 0.0
  %252 = vmatprep.subr.mxu0 0.0
  %253 = vmatpush1.msra.mxu0 0.0
  %254 = vmatprep.subr.mxu0 0.0
  %255 = vmatpush1.msra.mxu0 0.0
  %256 = vmatprep.subr.mxu0 0.0
  %257 = vmatpush1.msra.mxu0 0.0
  %258 = vmatprep.subr.mxu0 0.0
  %259 = vmatpush1.msra.mxu0 0.0
  %260 = vmatprep.subr.mxu0 0.0
  %261 = vmatpush1.msra.mxu0 0.0
  %262 = vmatprep.subr.mxu0 0.0
  %263 = vmatpush1.msra.mxu0 0.0
  %264 = vmatprep.subr.mxu0 0.0
  %265 = vmatpush1.msra.mxu0 0.0
  %266 = vmatprep.subr.mxu0 0.0
  %267 = vmatpush1.msra.mxu0 0.0
  %268 = vmatprep.subr.mxu0 0.0
  %269 = vmatpush1.msra.mxu0 0.0
  %270 = vmatprep.subr.mxu0 0.0
  %271 = vmatpush1.msra.mxu0 0.0
  %272 = vmatprep.subr.mxu0 0.0
  %273 = vmatpush1.msra.mxu0 0.0
  %274 = vmatprep.subr.mxu0 0.0
  %275 = vmatpush1.msra.mxu0 0.0
  %276 = vmatprep.subr.mxu0 0.0
  %277 = vmatpush1.msra.mxu0 %v242
  %278 = vmatprep.subr.mxu0 0.0
  %279 = vmatpush1.msra.mxu0 %v240
  %280 = vmatprep.subr.mxu0 0.0
  %281 = vmatpush2.msra.mxu0 0.0
  %282 = vmatprep.subr.mxu0 0.0
  %283 = vmatpush2.msra.mxu0 0.0
  %284 = vmatprep.subr.mxu0 0.0
  %285 = vmatpush2.msra.mxu0 0.0
  %286 = vmatprep.subr.mxu0 0.0
  %287 = vmatpush2.msra.mxu0 0.0
  %288 = vmatprep.subr.mxu0 0.0
  %289 = vmatpush2.msra.mxu0 0.0
  %290 = vmatprep.subr.mxu0 0.0
  %291 = vmatpush2.msra.mxu0 0.0
  %292 = vmatprep.subr.mxu0 0.0
  %293 = vmatpush2.msra.mxu0 0.0
  %294 = vmatprep.subr.mxu0 0.0
  %295 = vmatpush2.msra.mxu0 0.0
  %296 = vmatprep.subr.mxu0 0.0
  %297 = vmatpush2.msra.mxu0 0.0
  %298 = vmatprep.subr.mxu0 0.0
  %299 = vmatpush2.msra.mxu0 0.0
  %300 = vmatprep.subr.mxu0 0.0
  %301 = vmatpush2.msra.mxu0 0.0
  %302 = vmatprep.subr.mxu0 0.0
  %303 = vmatpush2.msra.mxu0 0.0
  %304 = vmatprep.subr.mxu0 0.0
  %305 = vmatpush2.msra.mxu0 0.0
  %306 = vmatprep.subr.mxu0 0.0
  %307 = vmatpush2.msra.mxu0 0.0
  %308 = vmatprep.subr.mxu0 0.0
  %309 = vmatpush2.msra.mxu0 0.0
  %310 = vmatprep.subr.mxu0 0.0
  %311 = vmatpush2.msra.mxu0 0.0
  %312 = vmatprep.mubr.f32.mxu0 0.0
  %313 = vmatmul.mubr.f32.gmra.mxu0 %v246
  %v314 = vpop.f32.mrf.mxu0
  %v315 = vadd.f32 0.0, %v314
  %v316 = vpop.f32.mrf.mxu0
  %317 = vdwg.mxu0
  %318 = vst.msk [vmem:[#allocation2] sm:$0xff] %vm149, %v315
  %319 = vrot.lane.b32.xlu0 %v115, 120
  %v320 = vpop.permute.xlu0 %319
  %321 = vrot.lane.b32.xlu0 %v125, 88
  %v322 = vpop.permute.xlu0 %321
  %323 = vrot.lane.b32.xlu0 %v130, 88
  %v324 = vpop.permute.xlu0 %323
  %v325 = vsel %vm149, %v320, 0
  %v327 = vsel %vm149, %v322, 0
  %v329 = vsel %vm149, %v324, 0
  %331 = vmatprep.subr.mxu0 0.0
  %332 = vmatpush1.xpose.msra.mxu0 0.0
  %333 = vmatprep.subr.mxu0 0.0
  %334 = vmatpush1.xpose.msra.mxu0 0.0
  %335 = vmatprep.subr.mxu0 0.0
  %336 = vmatpush1.xpose.msra.mxu0 0.0
  %337 = vmatprep.subr.mxu0 0.0
  %338 = vmatpush1.xpose.msra.mxu0 0.0
  %339 = vmatprep.subr.mxu0 0.0
  %340 = vmatpush1.xpose.msra.mxu0 0.0
  %341 = vmatprep.subr.mxu0 0.0
  %342 = vmatpush1.xpose.msra.mxu0 0.0
  %343 = vmatprep.subr.mxu0 0.0
  %344 = vmatpush1.xpose.msra.mxu0 0.0
  %345 = vmatprep.subr.mxu0 0.0
  %346 = vmatpush1.xpose.msra.mxu0 0.0
  %347 = vmatprep.subr.mxu0 0.0
  %348 = vmatpush1.xpose.msra.mxu0 0.0
  %349 = vmatprep.subr.mxu0 0.0
  %350 = vmatpush1.xpose.msra.mxu0 0.0
  %351 = vmatprep.subr.mxu0 0.0
  %352 = vmatpush1.xpose.msra.mxu0 0.0
  %353 = vmatprep.subr.mxu0 0.0
  %354 = vmatpush1.xpose.msra.mxu0 0.0
  %355 = vmatprep.subr.mxu0 0.0
  %356 = vmatpush1.xpose.msra.mxu0 0.0
  %357 = vmatprep.subr.mxu0 0.0
  %358 = vmatpush1.xpose.msra.mxu0 0.0
  %359 = vmatprep.subr.mxu0 0.0
  %360 = vmatpush1.xpose.msra.mxu0 %v329
  %361 = vmatprep.subr.mxu0 0.0
  %362 = vmatpush1.xpose.msra.mxu0 %v327
  %363 = vmatprep.subr.mxu0 0.0
  %364 = vmatpush2.xpose.msra.mxu0 0.0
  %365 = vmatprep.subr.mxu0 0.0
  %366 = vmatpush2.xpose.msra.mxu0 0.0
  %367 = vmatprep.subr.mxu0 0.0
  %368 = vmatpush2.xpose.msra.mxu0 0.0
  %369 = vmatprep.subr.mxu0 0.0
  %370 = vmatpush2.xpose.msra.mxu0 0.0
  %371 = vmatprep.subr.mxu0 0.0
  %372 = vmatpush2.xpose.msra.mxu0 0.0
  %373 = vmatprep.subr.mxu0 0.0
  %374 = vmatpush2.xpose.msra.mxu0 0.0
  %375 = vmatprep.subr.mxu0 0.0
  %376 = vmatpush2.xpose.msra.mxu0 0.0
  %377 = vmatprep.subr.mxu0 0.0
  %378 = vmatpush2.xpose.msra.mxu0 0.0
  %379 = vmatprep.subr.mxu0 0.0
  %380 = vmatpush2.xpose.msra.mxu0 0.0
  %381 = vmatprep.subr.mxu0 0.0
  %382 = vmatpush2.xpose.msra.mxu0 0.0
  %383 = vmatprep.subr.mxu0 0.0
  %384 = vmatpush2.xpose.msra.mxu0 0.0
  %385 = vmatprep.subr.mxu0 0.0
  %386 = vmatpush2.xpose.msra.mxu0 0.0
  %387 = vmatprep.subr.mxu0 0.0
  %388 = vmatpush2.xpose.msra.mxu0 0.0
  %389 = vmatprep.subr.mxu0 0.0
  %390 = vmatpush2.xpose.msra.mxu0 0.0
  %391 = vmatprep.subr.mxu0 0.0
  %392 = vmatpush2.xpose.msra.mxu0 0.0
  %393 = vmatprep.subr.mxu0 0.0
  %394 = vmatpush2.xpose.msra.mxu0 0.0
  %395 = vmatprep.mubr.f32.mxu0 0.0
  %396 = vmatmul.mubr.f32.gmra.mxu0 %v325
  %v397 = vpop.f32.mrf.mxu0
  %v398 = vadd.f32 0.0, %v397
  %v399 = vpop.f32.mrf.mxu0
  %400 = vdwg.mxu0
  %v401 = vsel %vm227, %v398, -inf
  %402 = vmax.xlane.f32.xlu0 %v401
  %v403 = vpop.xlane.xlu0 %402
  %v404 = vsub.f32 %v398, %v403
  %v405 = vmul.f32 %v404, 1.442695
  %v406 = vpow.pop %v405
  %v407 = vsel %vm227, %v406, 0.0
  %408 = vadd.xlane.f32.xlu0 %v407
  %v409 = vpop.xlane.xlu0 %408
  %v410 = vrcp.pop %v409
  %v411 = vmul.f32 %v406, %v410
  %412 = vrot.lane.b32.xlu0 %v125, 56
  %v413 = vpop.permute.xlu0 %412
  %414 = vrot.lane.b32.xlu0 %v130, 56
  %v415 = vpop.permute.xlu0 %414
  %v419 = vsel %vm227, %v411, 0
  %421 = vmatprep.subr.mxu0 0.0
  %422 = vmatpush1.msra.mxu0 0.0
  %423 = vmatprep.subr.mxu0 0.0
  %424 = vmatpush1.msra.mxu0 0.0
  %425 = vmatprep.subr.mxu0 0.0
  %426 = vmatpush1.msra.mxu0 0.0
  %427 = vmatprep.subr.mxu0 0.0
  %428 = vmatpush1.msra.mxu0 0.0
  %429 = vmatprep.subr.mxu0 0.0
  %430 = vmatpush1.msra.mxu0 0.0
  %431 = vmatprep.subr.mxu0 0.0
  %432 = vmatpush1.msra.mxu0 0.0
  %433 = vmatprep.subr.mxu0 0.0
  %434 = vmatpush1.msra.mxu0 0.0
  %435 = vmatprep.subr.mxu0 0.0
  %436 = vmatpush1.msra.mxu0 0.0
  %437 = vmatprep.subr.mxu0 0.0
  %438 = vmatpush1.msra.mxu0 0.0
  %439 = vmatprep.subr.mxu0 0.0
  %440 = vmatpush1.msra.mxu0 0.0
  %441 = vmatprep.subr.mxu0 0.0
  %442 = vmatpush1.msra.mxu0 0.0
  %443 = vmatprep.subr.mxu0 0.0
  %444 = vmatpush1.msra.mxu0 0.0
  %445 = vmatprep.subr.mxu0 0.0
  %446 = vmatpush1.msra.mxu0 0.0
  %447 = vmatprep.subr.mxu0 0.0
  %448 = vmatpush1.msra.mxu0 0.0
  %449 = vmatprep.subr.mxu0 0.0
  %450 = vmatpush1.msra.mxu0 %v415
  %451 = vmatprep.subr.mxu0 0.0
  %452 = vmatpush1.msra.mxu0 %v413
  %453 = vmatprep.subr.mxu0 0.0
  %454 = vmatpush2.msra.mxu0 0.0
  %455 = vmatprep.subr.mxu0 0.0
  %456 = vmatpush2.msra.mxu0 0.0
  %457 = vmatprep.subr.mxu0 0.0
  %458 = vmatpush2.msra.mxu0 0.0
  %459 = vmatprep.subr.mxu0 0.0
  %460 = vmatpush2.msra.mxu0 0.0
  %461 = vmatprep.subr.mxu0 0.0
  %462 = vmatpush2.msra.mxu0 0.0
  %463 = vmatprep.subr.mxu0 0.0
  %464 = vmatpush2.msra.mxu0 0.0
  %465 = vmatprep.subr.mxu0 0.0
  %466 = vmatpush2.msra.mxu0 0.0
  %467 = vmatprep.subr.mxu0 0.0
  %468 = vmatpush2.msra.mxu0 0.0
  %469 = vmatprep.subr.mxu0 0.0
  %470 = vmatpush2.msra.mxu0 0.0
  %471 = vmatprep.subr.mxu0 0.0
  %472 = vmatpush2.msra.mxu0 0.0
  %473 = vmatprep.subr.mxu0 0.0
  %474 = vmatpush2.msra.mxu0 0.0
  %475 = vmatprep.subr.mxu0 0.0
  %476 = vmatpush2.msra.mxu0 0.0
  %477 = vmatprep.subr.mxu0 0.0
  %478 = vmatpush2.msra.mxu0 0.0
  %479 = vmatprep.subr.mxu0 0.0
  %480 = vmatpush2.msra.mxu0 0.0
  %481 = vmatprep.subr.mxu0 0.0
  %482 = vmatpush2.msra.mxu0 0.0
  %483 = vmatprep.subr.mxu0 0.0
  %484 = vmatpush2.msra.mxu0 0.0
  %485 = vmatprep.mubr.f32.mxu0 0.0
  %486 = vmatmul.mubr.f32.gmra.mxu0 %v419
  %v487 = vpop.f32.mrf.mxu0
  %v488 = vadd.f32 0.0, %v487
  %v489 = vpop.f32.mrf.mxu0
  %490 = vdwg.mxu0
  %492 = vrot.lane.b32.xlu0 %v488, 8
  %v493 = vpop.permute.xlu0 %492
  %vm495 = vcmask 130112
  %496 = vst.msk [vmem:[#allocation2] sm:$0xff] %vm495, %v493
  %497 = vrot.lane.b32.xlu0 %v115, 112
  %v498 = vpop.permute.xlu0 %497
  %499 = vrot.lane.b32.xlu0 %v125, 80
  %v500 = vpop.permute.xlu0 %499
  %501 = vrot.lane.b32.xlu0 %v130, 80
  %v502 = vpop.permute.xlu0 %501
  %v503 = vsel %vm149, %v498, 0
  %v505 = vsel %vm149, %v500, 0
  %v507 = vsel %vm149, %v502, 0
  %509 = vmatprep.subr.mxu0 0.0
  %510 = vmatpush1.xpose.msra.mxu0 0.0
  %511 = vmatprep.subr.mxu0 0.0
  %512 = vmatpush1.xpose.msra.mxu0 0.0
  %513 = vmatprep.subr.mxu0 0.0
  %514 = vmatpush1.xpose.msra.mxu0 0.0
  %515 = vmatprep.subr.mxu0 0.0
  %516 = vmatpush1.xpose.msra.mxu0 0.0
  %517 = vmatprep.subr.mxu0 0.0
  %518 = vmatpush1.xpose.msra.mxu0 0.0
  %519 = vmatprep.subr.mxu0 0.0
  %520 = vmatpush1.xpose.msra.mxu0 0.0
  %521 = vmatprep.subr.mxu0 0.0
  %522 = vmatpush1.xpose.msra.mxu0 0.0
  %523 = vmatprep.subr.mxu0 0.0
  %524 = vmatpush1.xpose.msra.mxu0 0.0
  %525 = vmatprep.subr.mxu0 0.0
  %526 = vmatpush1.xpose.msra.mxu0 0.0
  %527 = vmatprep.subr.mxu0 0.0
  %528 = vmatpush1.xpose.msra.mxu0 0.0
  %529 = vmatprep.subr.mxu0 0.0
  %530 = vmatpush1.xpose.msra.mxu0 0.0
  %531 = vmatprep.subr.mxu0 0.0
  %532 = vmatpush1.xpose.msra.mxu0 0.0
  %533 = vmatprep.subr.mxu0 0.0
  %534 = vmatpush1.xpose.msra.mxu0 0.0
  %535 = vmatprep.subr.mxu0 0.0
  %536 = vmatpush1.xpose.msra.mxu0 0.0
  %537 = vmatprep.subr.mxu0 0.0
  %538 = vmatpush1.xpose.msra.mxu0 %v507
  %539 = vmatprep.subr.mxu0 0.0
  %540 = vmatpush1.xpose.msra.mxu0 %v505
  %541 = vmatprep.subr.mxu0 0.0
  %542 = vmatpush2.xpose.msra.mxu0 0.0
  %543 = vmatprep.subr.mxu0 0.0
  %544 = vmatpush2.xpose.msra.mxu0 0.0
  %545 = vmatprep.subr.mxu0 0.0
  %546 = vmatpush2.xpose.msra.mxu0 0.0
  %547 = vmatprep.subr.mxu0 0.0
  %548 = vmatpush2.xpose.msra.mxu0 0.0
  %549 = vmatprep.subr.mxu0 0.0
  %550 = vmatpush2.xpose.msra.mxu0 0.0
  %551 = vmatprep.subr.mxu0 0.0
  %552 = vmatpush2.xpose.msra.mxu0 0.0
  %553 = vmatprep.subr.mxu0 0.0
  %554 = vmatpush2.xpose.msra.mxu0 0.0
  %555 = vmatprep.subr.mxu0 0.0
  %556 = vmatpush2.xpose.msra.mxu0 0.0
  %557 = vmatprep.subr.mxu0 0.0
  %558 = vmatpush2.xpose.msra.mxu0 0.0
  %559 = vmatprep.subr.mxu0 0.0
  %560 = vmatpush2.xpose.msra.mxu0 0.0
  %561 = vmatprep.subr.mxu0 0.0
  %562 = vmatpush2.xpose.msra.mxu0 0.0
  %563 = vmatprep.subr.mxu0 0.0
  %564 = vmatpush2.xpose.msra.mxu0 0.0
  %565 = vmatprep.subr.mxu0 0.0
  %566 = vmatpush2.xpose.msra.mxu0 0.0
  %567 = vmatprep.subr.mxu0 0.0
  %568 = vmatpush2.xpose.msra.mxu0 0.0
  %569 = vmatprep.subr.mxu0 0.0
  %570 = vmatpush2.xpose.msra.mxu0 0.0
  %571 = vmatprep.subr.mxu0 0.0
  %572 = vmatpush2.xpose.msra.mxu0 0.0
  %573 = vmatprep.mubr.f32.mxu0 0.0
  %574 = vmatmul.mubr.f32.gmra.mxu0 %v503
  %v575 = vpop.f32.mrf.mxu0
  %v576 = vadd.f32 0.0, %v575
  %v577 = vpop.f32.mrf.mxu0
  %578 = vdwg.mxu0
  %v579 = vsel %vm227, %v576, -inf
  %580 = vmax.xlane.f32.xlu0 %v579
  %v581 = vpop.xlane.xlu0 %580
  %v582 = vsub.f32 %v576, %v581
  %v583 = vmul.f32 %v582, 1.442695
  %v584 = vpow.pop %v583
  %v585 = vsel %vm227, %v584, 0.0
  %586 = vadd.xlane.f32.xlu0 %v585
  %v587 = vpop.xlane.xlu0 %586
  %v588 = vrcp.pop %v587
  %v589 = vmul.f32 %v584, %v588
  %590 = vrot.lane.b32.xlu0 %v125, 48
  %v591 = vpop.permute.xlu0 %590
  %592 = vrot.lane.b32.xlu0 %v130, 48
  %v593 = vpop.permute.xlu0 %592
  %v597 = vsel %vm227, %v589, 0
  %599 = vmatprep.subr.mxu0 0.0
  %600 = vmatpush1.msra.mxu0 0.0
  %601 = vmatprep.subr.mxu0 0.0
  %602 = vmatpush1.msra.mxu0 0.0
  %603 = vmatprep.subr.mxu0 0.0
  %604 = vmatpush1.msra.mxu0 0.0
  %605 = vmatprep.subr.mxu0 0.0
  %606 = vmatpush1.msra.mxu0 0.0
  %607 = vmatprep.subr.mxu0 0.0
  %608 = vmatpush1.msra.mxu0 0.0
  %609 = vmatprep.subr.mxu0 0.0
  %610 = vmatpush1.msra.mxu0 0.0
  %611 = vmatprep.subr.mxu0 0.0
  %612 = vmatpush1.msra.mxu0 0.0
  %613 = vmatprep.subr.mxu0 0.0
  %614 = vmatpush1.msra.mxu0 0.0
  %615 = vmatprep.subr.mxu0 0.0
  %616 = vmatpush1.msra.mxu0 0.0
  %617 = vmatprep.subr.mxu0 0.0
  %618 = vmatpush1.msra.mxu0 0.0
  %619 = vmatprep.subr.mxu0 0.0
  %620 = vmatpush1.msra.mxu0 0.0
  %621 = vmatprep.subr.mxu0 0.0
  %622 = vmatpush1.msra.mxu0 0.0
  %623 = vmatprep.subr.mxu0 0.0
  %624 = vmatpush1.msra.mxu0 0.0
  %625 = vmatprep.subr.mxu0 0.0
  %626 = vmatpush1.msra.mxu0 0.0
  %627 = vmatprep.subr.mxu0 0.0
  %628 = vmatpush1.msra.mxu0 %v593
  %629 = vmatprep.subr.mxu0 0.0
  %630 = vmatpush1.msra.mxu0 %v591
  %631 = vmatprep.subr.mxu0 0.0
  %632 = vmatpush2.msra.mxu0 0.0
  %633 = vmatprep.subr.mxu0 0.0
  %634 = vmatpush2.msra.mxu0 0.0
  %635 = vmatprep.subr.mxu0 0.0
  %636 = vmatpush2.msra.mxu0 0.0
  %637 = vmatprep.subr.mxu0 0.0
  %638 = vmatpush2.msra.mxu0 0.0
  %639 = vmatprep.subr.mxu0 0.0
  %640 = vmatpush2.msra.mxu0 0.0
  %641 = vmatprep.subr.mxu0 0.0
  %642 = vmatpush2.msra.mxu0 0.0
  %643 = vmatprep.subr.mxu0 0.0
  %644 = vmatpush2.msra.mxu0 0.0
  %645 = vmatprep.subr.mxu0 0.0
  %646 = vmatpush2.msra.mxu0 0.0
  %647 = vmatprep.subr.mxu0 0.0
  %648 = vmatpush2.msra.mxu0 0.0
  %649 = vmatprep.subr.mxu0 0.0
  %650 = vmatpush2.msra.mxu0 0.0
  %651 = vmatprep.subr.mxu0 0.0
  %652 = vmatpush2.msra.mxu0 0.0
  %653 = vmatprep.subr.mxu0 0.0
  %654 = vmatpush2.msra.mxu0 0.0
  %655 = vmatprep.subr.mxu0 0.0
  %656 = vmatpush2.msra.mxu0 0.0
  %657 = vmatprep.subr.mxu0 0.0
  %658 = vmatpush2.msra.mxu0 0.0
  %659 = vmatprep.subr.mxu0 0.0
  %660 = vmatpush2.msra.mxu0 0.0
  %661 = vmatprep.subr.mxu0 0.0
  %662 = vmatpush2.msra.mxu0 0.0
  %663 = vmatprep.mubr.f32.mxu0 0.0
  %664 = vmatmul.mubr.f32.gmra.mxu0 %v597
  %v665 = vpop.f32.mrf.mxu0
  %v666 = vadd.f32 0.0, %v665
  %v667 = vpop.f32.mrf.mxu0
  %668 = vdwg.mxu0
  %670 = vrot.lane.b32.xlu0 %v666, 16
  %v671 = vpop.permute.xlu0 %670
  %vm673 = vcmask 195712
  %674 = vst.msk [vmem:[#allocation2] sm:$0xff] %vm673, %v671
  %675 = vrot.lane.b32.xlu0 %v115, 104
  %v676 = vpop.permute.xlu0 %675
  %677 = vrot.lane.b32.xlu0 %v125, 72
  %v678 = vpop.permute.xlu0 %677
  %679 = vrot.lane.b32.xlu0 %v130, 72
  %v680 = vpop.permute.xlu0 %679
  %v681 = vsel %vm149, %v676, 0
  %v683 = vsel %vm149, %v678, 0
  %v685 = vsel %vm149, %v680, 0
  %687 = vmatprep.subr.mxu0 0.0
  %688 = vmatpush1.xpose.msra.mxu0 0.0
  %689 = vmatprep.subr.mxu0 0.0
  %690 = vmatpush1.xpose.msra.mxu0 0.0
  %691 = vmatprep.subr.mxu0 0.0
  %692 = vmatpush1.xpose.msra.mxu0 0.0
  %693 = vmatprep.subr.mxu0 0.0
  %694 = vmatpush1.xpose.msra.mxu0 0.0
  %695 = vmatprep.subr.mxu0 0.0
  %696 = vmatpush1.xpose.msra.mxu0 0.0
  %697 = vmatprep.subr.mxu0 0.0
  %698 = vmatpush1.xpose.msra.mxu0 0.0
  %699 = vmatprep.subr.mxu0 0.0
  %700 = vmatpush1.xpose.msra.mxu0 0.0
  %701 = vmatprep.subr.mxu0 0.0
  %702 = vmatpush1.xpose.msra.mxu0 0.0
  %703 = vmatprep.subr.mxu0 0.0
  %704 = vmatpush1.xpose.msra.mxu0 0.0
  %705 = vmatprep.subr.mxu0 0.0
  %706 = vmatpush1.xpose.msra.mxu0 0.0
  %707 = vmatprep.subr.mxu0 0.0
  %708 = vmatpush1.xpose.msra.mxu0 0.0
  %709 = vmatprep.subr.mxu0 0.0
  %710 = vmatpush1.xpose.msra.mxu0 0.0
  %711 = vmatprep.subr.mxu0 0.0
  %712 = vmatpush1.xpose.msra.mxu0 0.0
  %713 = vmatprep.subr.mxu0 0.0
  %714 = vmatpush1.xpose.msra.mxu0 0.0
  %715 = vmatprep.subr.mxu0 0.0
  %716 = vmatpush1.xpose.msra.mxu0 %v685
  %717 = vmatprep.subr.mxu0 0.0
  %718 = vmatpush1.xpose.msra.mxu0 %v683
  %719 = vmatprep.subr.mxu0 0.0
  %720 = vmatpush2.xpose.msra.mxu0 0.0
  %721 = vmatprep.subr.mxu0 0.0
  %722 = vmatpush2.xpose.msra.mxu0 0.0
  %723 = vmatprep.subr.mxu0 0.0
  %724 = vmatpush2.xpose.msra.mxu0 0.0
  %725 = vmatprep.subr.mxu0 0.0
  %726 = vmatpush2.xpose.msra.mxu0 0.0
  %727 = vmatprep.subr.mxu0 0.0
  %728 = vmatpush2.xpose.msra.mxu0 0.0
  %729 = vmatprep.subr.mxu0 0.0
  %730 = vmatpush2.xpose.msra.mxu0 0.0
  %731 = vmatprep.subr.mxu0 0.0
  %732 = vmatpush2.xpose.msra.mxu0 0.0
  %733 = vmatprep.subr.mxu0 0.0
  %734 = vmatpush2.xpose.msra.mxu0 0.0
  %735 = vmatprep.subr.mxu0 0.0
  %736 = vmatpush2.xpose.msra.mxu0 0.0
  %737 = vmatprep.subr.mxu0 0.0
  %738 = vmatpush2.xpose.msra.mxu0 0.0
  %739 = vmatprep.subr.mxu0 0.0
  %740 = vmatpush2.xpose.msra.mxu0 0.0
  %741 = vmatprep.subr.mxu0 0.0
  %742 = vmatpush2.xpose.msra.mxu0 0.0
  %743 = vmatprep.subr.mxu0 0.0
  %744 = vmatpush2.xpose.msra.mxu0 0.0
  %745 = vmatprep.subr.mxu0 0.0
  %746 = vmatpush2.xpose.msra.mxu0 0.0
  %747 = vmatprep.subr.mxu0 0.0
  %748 = vmatpush2.xpose.msra.mxu0 0.0
  %749 = vmatprep.subr.mxu0 0.0
  %750 = vmatpush2.xpose.msra.mxu0 0.0
  %751 = vmatprep.mubr.f32.mxu0 0.0
  %752 = vmatmul.mubr.f32.gmra.mxu0 %v681
  %v753 = vpop.f32.mrf.mxu0
  %v754 = vadd.f32 0.0, %v753
  %v755 = vpop.f32.mrf.mxu0
  %756 = vdwg.mxu0
  %v757 = vsel %vm227, %v754, -inf
  %758 = vmax.xlane.f32.xlu0 %v757
  %v759 = vpop.xlane.xlu0 %758
  %v760 = vsub.f32 %v754, %v759
  %v761 = vmul.f32 %v760, 1.442695
  %v762 = vpow.pop %v761
  %v763 = vsel %vm227, %v762, 0.0
  %764 = vadd.xlane.f32.xlu0 %v763
  %v765 = vpop.xlane.xlu0 %764
  %v766 = vrcp.pop %v765
  %v767 = vmul.f32 %v762, %v766
  %768 = vrot.lane.b32.xlu0 %v125, 40
  %v769 = vpop.permute.xlu0 %768
  %770 = vrot.lane.b32.xlu0 %v130, 40
  %v771 = vpop.permute.xlu0 %770
  %v775 = vsel %vm227, %v767, 0
  %777 = vmatprep.subr.mxu0 0.0
  %778 = vmatpush1.msra.mxu0 0.0
  %779 = vmatprep.subr.mxu0 0.0
  %780 = vmatpush1.msra.mxu0 0.0
  %781 = vmatprep.subr.mxu0 0.0
  %782 = vmatpush1.msra.mxu0 0.0
  %783 = vmatprep.subr.mxu0 0.0
  %784 = vmatpush1.msra.mxu0 0.0
  %785 = vmatprep.subr.mxu0 0.0
  %786 = vmatpush1.msra.mxu0 0.0
  %787 = vmatprep.subr.mxu0 0.0
  %788 = vmatpush1.msra.mxu0 0.0
  %789 = vmatprep.subr.mxu0 0.0
  %790 = vmatpush1.msra.mxu0 0.0
  %791 = vmatprep.subr.mxu0 0.0
  %792 = vmatpush1.msra.mxu0 0.0
  %793 = vmatprep.subr.mxu0 0.0
  %794 = vmatpush1.msra.mxu0 0.0
  %795 = vmatprep.subr.mxu0 0.0
  %796 = vmatpush1.msra.mxu0 0.0
  %797 = vmatprep.subr.mxu0 0.0
  %798 = vmatpush1.msra.mxu0 0.0
  %799 = vmatprep.subr.mxu0 0.0
  %800 = vmatpush1.msra.mxu0 0.0
  %801 = vmatprep.subr.mxu0 0.0
  %802 = vmatpush1.msra.mxu0 0.0
  %803 = vmatprep.subr.mxu0 0.0
  %804 = vmatpush1.msra.mxu0 0.0
  %805 = vmatprep.subr.mxu0 0.0
  %806 = vmatpush1.msra.mxu0 %v771
  %807 = vmatprep.subr.mxu0 0.0
  %808 = vmatpush1.msra.mxu0 %v769
  %809 = vmatprep.subr.mxu0 0.0
  %810 = vmatpush2.msra.mxu0 0.0
  %811 = vmatprep.subr.mxu0 0.0
  %812 = vmatpush2.msra.mxu0 0.0
  %813 = vmatprep.subr.mxu0 0.0
  %814 = vmatpush2.msra.mxu0 0.0
  %815 = vmatprep.subr.mxu0 0.0
  %816 = vmatpush2.msra.mxu0 0.0
  %817 = vmatprep.subr.mxu0 0.0
  %818 = vmatpush2.msra.mxu0 0.0
  %819 = vmatprep.subr.mxu0 0.0
  %820 = vmatpush2.msra.mxu0 0.0
  %821 = vmatprep.subr.mxu0 0.0
  %822 = vmatpush2.msra.mxu0 0.0
  %823 = vmatprep.subr.mxu0 0.0
  %824 = vmatpush2.msra.mxu0 0.0
  %825 = vmatprep.subr.mxu0 0.0
  %826 = vmatpush2.msra.mxu0 0.0
  %827 = vmatprep.subr.mxu0 0.0
  %828 = vmatpush2.msra.mxu0 0.0
  %829 = vmatprep.subr.mxu0 0.0
  %830 = vmatpush2.msra.mxu0 0.0
  %831 = vmatprep.subr.mxu0 0.0
  %832 = vmatpush2.msra.mxu0 0.0
  %833 = vmatprep.subr.mxu0 0.0
  %834 = vmatpush2.msra.mxu0 0.0
  %835 = vmatprep.subr.mxu0 0.0
  %836 = vmatpush2.msra.mxu0 0.0
  %837 = vmatprep.subr.mxu0 0.0
  %838 = vmatpush2.msra.mxu0 0.0
  %839 = vmatprep.subr.mxu0 0.0
  %840 = vmatpush2.msra.mxu0 0.0
  %841 = vmatprep.mubr.f32.mxu0 0.0
  %842 = vmatmul.mubr.f32.gmra.mxu0 %v775
  %v843 = vpop.f32.mrf.mxu0
  %v844 = vadd.f32 0.0, %v843
  %v845 = vpop.f32.mrf.mxu0
  %846 = vdwg.mxu0
  %848 = vrot.lane.b32.xlu0 %v844, 24
  %v849 = vpop.permute.xlu0 %848
  %vm851 = vcmask 261312
  %852 = vst.msk [vmem:[#allocation2] sm:$0xff] %vm851, %v849
  %855 = vrot.lane.b32.xlu0 %v135, 96
  %v856 = vpop.permute.xlu0 %855
  %857 = vrot.lane.b32.xlu0 %v140, 96
  %v858 = vpop.permute.xlu0 %857
  %v860 = vsel %vm149, %v120, 0
  %v862 = vsel %vm149, %v856, 0
  %v864 = vsel %vm149, %v858, 0
  %866 = vmatprep.subr.mxu0 0.0
  %867 = vmatpush1.xpose.msra.mxu0 0.0
  %868 = vmatprep.subr.mxu0 0.0
  %869 = vmatpush1.xpose.msra.mxu0 0.0
  %870 = vmatprep.subr.mxu0 0.0
  %871 = vmatpush1.xpose.msra.mxu0 0.0
  %872 = vmatprep.subr.mxu0 0.0
  %873 = vmatpush1.xpose.msra.mxu0 0.0
  %874 = vmatprep.subr.mxu0 0.0
  %875 = vmatpush1.xpose.msra.mxu0 0.0
  %876 = vmatprep.subr.mxu0 0.0
  %877 = vmatpush1.xpose.msra.mxu0 0.0
  %878 = vmatprep.subr.mxu0 0.0
  %879 = vmatpush1.xpose.msra.mxu0 0.0
  %880 = vmatprep.subr.mxu0 0.0
  %881 = vmatpush1.xpose.msra.mxu0 0.0
  %882 = vmatprep.subr.mxu0 0.0
  %883 = vmatpush1.xpose.msra.mxu0 0.0
  %884 = vmatprep.subr.mxu0 0.0
  %885 = vmatpush1.xpose.msra.mxu0 0.0
  %886 = vmatprep.subr.mxu0 0.0
  %887 = vmatpush1.xpose.msra.mxu0 0.0
  %888 = vmatprep.subr.mxu0 0.0
  %889 = vmatpush1.xpose.msra.mxu0 0.0
  %890 = vmatprep.subr.mxu0 0.0
  %891 = vmatpush1.xpose.msra.mxu0 0.0
  %892 = vmatprep.subr.mxu0 0.0
  %893 = vmatpush1.xpose.msra.mxu0 0.0
  %894 = vmatprep.subr.mxu0 0.0
  %895 = vmatpush1.xpose.msra.mxu0 %v864
  %896 = vmatprep.subr.mxu0 0.0
  %897 = vmatpush1.xpose.msra.mxu0 %v862
  %898 = vmatprep.subr.mxu0 0.0
  %899 = vmatpush2.xpose.msra.mxu0 0.0
  %900 = vmatprep.subr.mxu0 0.0
  %901 = vmatpush2.xpose.msra.mxu0 0.0
  %902 = vmatprep.subr.mxu0 0.0
  %903 = vmatpush2.xpose.msra.mxu0 0.0
  %904 = vmatprep.subr.mxu0 0.0
  %905 = vmatpush2.xpose.msra.mxu0 0.0
  %906 = vmatprep.subr.mxu0 0.0
  %907 = vmatpush2.xpose.msra.mxu0 0.0
  %908 = vmatprep.subr.mxu0 0.0
  %909 = vmatpush2.xpose.msra.mxu0 0.0
  %910 = vmatprep.subr.mxu0 0.0
  %911 = vmatpush2.xpose.msra.mxu0 0.0
  %912 = vmatprep.subr.mxu0 0.0
  %913 = vmatpush2.xpose.msra.mxu0 0.0
  %914 = vmatprep.subr.mxu0 0.0
  %915 = vmatpush2.xpose.msra.mxu0 0.0
  %916 = vmatprep.subr.mxu0 0.0
  %917 = vmatpush2.xpose.msra.mxu0 0.0
  %918 = vmatprep.subr.mxu0 0.0
  %919 = vmatpush2.xpose.msra.mxu0 0.0
  %920 = vmatprep.subr.mxu0 0.0
  %921 = vmatpush2.xpose.msra.mxu0 0.0
  %922 = vmatprep.subr.mxu0 0.0
  %923 = vmatpush2.xpose.msra.mxu0 0.0
  %924 = vmatprep.subr.mxu0 0.0
  %925 = vmatpush2.xpose.msra.mxu0 0.0
  %926 = vmatprep.subr.mxu0 0.0
  %927 = vmatpush2.xpose.msra.mxu0 0.0
  %928 = vmatprep.subr.mxu0 0.0
  %929 = vmatpush2.xpose.msra.mxu0 0.0
  %930 = vmatprep.mubr.f32.mxu0 0.0
  %931 = vmatmul.mubr.f32.gmra.mxu0 %v860
  %v932 = vpop.f32.mrf.mxu0
  %v933 = vadd.f32 0.0, %v932
  %v934 = vpop.f32.mrf.mxu0
  %935 = vdwg.mxu0
  %v936 = vsel %vm227, %v933, -inf
  %937 = vmax.xlane.f32.xlu0 %v936
  %v938 = vpop.xlane.xlu0 %937
  %v939 = vsub.f32 %v933, %v938
  %v940 = vmul.f32 %v939, 1.442695
  %v941 = vpow.pop %v940
  %v942 = vsel %vm227, %v941, 0.0
  %943 = vadd.xlane.f32.xlu0 %v942
  %v944 = vpop.xlane.xlu0 %943
  %v945 = vrcp.pop %v944
  %v946 = vmul.f32 %v941, %v945
  %947 = vrot.lane.b32.xlu0 %v135, 64
  %v948 = vpop.permute.xlu0 %947
  %949 = vrot.lane.b32.xlu0 %v140, 64
  %v950 = vpop.permute.xlu0 %949
  %v954 = vsel %vm227, %v946, 0
  %956 = vmatprep.subr.mxu0 0.0
  %957 = vmatpush1.msra.mxu0 0.0
  %958 = vmatprep.subr.mxu0 0.0
  %959 = vmatpush1.msra.mxu0 0.0
  %960 = vmatprep.subr.mxu0 0.0
  %961 = vmatpush1.msra.mxu0 0.0
  %962 = vmatprep.subr.mxu0 0.0
  %963 = vmatpush1.msra.mxu0 0.0
  %964 = vmatprep.subr.mxu0 0.0
  %965 = vmatpush1.msra.mxu0 0.0
  %966 = vmatprep.subr.mxu0 0.0
  %967 = vmatpush1.msra.mxu0 0.0
  %968 = vmatprep.subr.mxu0 0.0
  %969 = vmatpush1.msra.mxu0 0.0
  %970 = vmatprep.subr.mxu0 0.0
  %971 = vmatpush1.msra.mxu0 0.0
  %972 = vmatprep.subr.mxu0 0.0
  %973 = vmatpush1.msra.mxu0 0.0
  %974 = vmatprep.subr.mxu0 0.0
  %975 = vmatpush1.msra.mxu0 0.0
  %976 = vmatprep.subr.mxu0 0.0
  %977 = vmatpush1.msra.mxu0 0.0
  %978 = vmatprep.subr.mxu0 0.0
  %979 = vmatpush1.msra.mxu0 0.0
  %980 = vmatprep.subr.mxu0 0.0
  %981 = vmatpush1.msra.mxu0 0.0
  %982 = vmatprep.subr.mxu0 0.0
  %983 = vmatpush1.msra.mxu0 0.0
  %984 = vmatprep.subr.mxu0 0.0
  %985 = vmatpush1.msra.mxu0 %v950
  %986 = vmatprep.subr.mxu0 0.0
  %987 = vmatpush1.msra.mxu0 %v948
  %988 = vmatprep.subr.mxu0 0.0
  %989 = vmatpush2.msra.mxu0 0.0
  %990 = vmatprep.subr.mxu0 0.0
  %991 = vmatpush2.msra.mxu0 0.0
  %992 = vmatprep.subr.mxu0 0.0
  %993 = vmatpush2.msra.mxu0 0.0
  %994 = vmatprep.subr.mxu0 0.0
  %995 = vmatpush2.msra.mxu0 0.0
  %996 = vmatprep.subr.mxu0 0.0
  %997 = vmatpush2.msra.mxu0 0.0
  %998 = vmatprep.subr.mxu0 0.0
  %999 = vmatpush2.msra.mxu0 0.0
  %1000 = vmatprep.subr.mxu0 0.0
  %1001 = vmatpush2.msra.mxu0 0.0
  %1002 = vmatprep.subr.mxu0 0.0
  %1003 = vmatpush2.msra.mxu0 0.0
  %1004 = vmatprep.subr.mxu0 0.0
  %1005 = vmatpush2.msra.mxu0 0.0
  %1006 = vmatprep.subr.mxu0 0.0
  %1007 = vmatpush2.msra.mxu0 0.0
  %1008 = vmatprep.subr.mxu0 0.0
  %1009 = vmatpush2.msra.mxu0 0.0
  %1010 = vmatprep.subr.mxu0 0.0
  %1011 = vmatpush2.msra.mxu0 0.0
  %1012 = vmatprep.subr.mxu0 0.0
  %1013 = vmatpush2.msra.mxu0 0.0
  %1014 = vmatprep.subr.mxu0 0.0
  %1015 = vmatpush2.msra.mxu0 0.0
  %1016 = vmatprep.subr.mxu0 0.0
  %1017 = vmatpush2.msra.mxu0 0.0
  %1018 = vmatprep.subr.mxu0 0.0
  %1019 = vmatpush2.msra.mxu0 0.0
  %1020 = vmatprep.mubr.f32.mxu0 0.0
  %1021 = vmatmul.mubr.f32.gmra.mxu0 %v954
  %v1022 = vpop.f32.mrf.mxu0
  %v1023 = vadd.f32 0.0, %v1022
  %v1024 = vpop.f32.mrf.mxu0
  %1025 = vdwg.mxu0
  %1026 = vst.msk [vmem:[#allocation2 + $0x8] sm:$0xff] %vm149, %v1023
  %1027 = vrot.lane.b32.xlu0 %v120, 120
  %v1028 = vpop.permute.xlu0 %1027
  %1029 = vrot.lane.b32.xlu0 %v135, 88
  %v1030 = vpop.permute.xlu0 %1029
  %1031 = vrot.lane.b32.xlu0 %v140, 88
  %v1032 = vpop.permute.xlu0 %1031
  %v1033 = vsel %vm149, %v1028, 0
  %v1035 = vsel %vm149, %v1030, 0
  %v1037 = vsel %vm149, %v1032, 0
  %1039 = vmatprep.subr.mxu0 0.0
  %1040 = vmatpush1.xpose.msra.mxu0 0.0
  %1041 = vmatprep.subr.mxu0 0.0
  %1042 = vmatpush1.xpose.msra.mxu0 0.0
  %1043 = vmatprep.subr.mxu0 0.0
  %1044 = vmatpush1.xpose.msra.mxu0 0.0
  %1045 = vmatprep.subr.mxu0 0.0
  %1046 = vmatpush1.xpose.msra.mxu0 0.0
  %1047 = vmatprep.subr.mxu0 0.0
  %1048 = vmatpush1.xpose.msra.mxu0 0.0
  %1049 = vmatprep.subr.mxu0 0.0
  %1050 = vmatpush1.xpose.msra.mxu0 0.0
  %1051 = vmatprep.subr.mxu0 0.0
  %1052 = vmatpush1.xpose.msra.mxu0 0.0
  %1053 = vmatprep.subr.mxu0 0.0
  %1054 = vmatpush1.xpose.msra.mxu0 0.0
  %1055 = vmatprep.subr.mxu0 0.0
  %1056 = vmatpush1.xpose.msra.mxu0 0.0
  %1057 = vmatprep.subr.mxu0 0.0
  %1058 = vmatpush1.xpose.msra.mxu0 0.0
  %1059 = vmatprep.subr.mxu0 0.0
  %1060 = vmatpush1.xpose.msra.mxu0 0.0
  %1061 = vmatprep.subr.mxu0 0.0
  %1062 = vmatpush1.xpose.msra.mxu0 0.0
  %1063 = vmatprep.subr.mxu0 0.0
  %1064 = vmatpush1.xpose.msra.mxu0 0.0
  %1065 = vmatprep.subr.mxu0 0.0
  %1066 = vmatpush1.xpose.msra.mxu0 0.0
  %1067 = vmatprep.subr.mxu0 0.0
  %1068 = vmatpush1.xpose.msra.mxu0 %v1037
  %1069 = vmatprep.subr.mxu0 0.0
  %1070 = vmatpush1.xpose.msra.mxu0 %v1035
  %1071 = vmatprep.subr.mxu0 0.0
  %1072 = vmatpush2.xpose.msra.mxu0 0.0
  %1073 = vmatprep.subr.mxu0 0.0
  %1074 = vmatpush2.xpose.msra.mxu0 0.0
  %1075 = vmatprep.subr.mxu0 0.0
  %1076 = vmatpush2.xpose.msra.mxu0 0.0
  %1077 = vmatprep.subr.mxu0 0.0
  %1078 = vmatpush2.xpose.msra.mxu0 0.0
  %1079 = vmatprep.subr.mxu0 0.0
  %1080 = vmatpush2.xpose.msra.mxu0 0.0
  %1081 = vmatprep.subr.mxu0 0.0
  %1082 = vmatpush2.xpose.msra.mxu0 0.0
  %1083 = vmatprep.subr.mxu0 0.0
  %1084 = vmatpush2.xpose.msra.mxu0 0.0
  %1085 = vmatprep.subr.mxu0 0.0
  %1086 = vmatpush2.xpose.msra.mxu0 0.0
  %1087 = vmatprep.subr.mxu0 0.0
  %1088 = vmatpush2.xpose.msra.mxu0 0.0
  %1089 = vmatprep.subr.mxu0 0.0
  %1090 = vmatpush2.xpose.msra.mxu0 0.0
  %1091 = vmatprep.subr.mxu0 0.0
  %1092 = vmatpush2.xpose.msra.mxu0 0.0
  %1093 = vmatprep.subr.mxu0 0.0
  %1094 = vmatpush2.xpose.msra.mxu0 0.0
  %1095 = vmatprep.subr.mxu0 0.0
  %1096 = vmatpush2.xpose.msra.mxu0 0.0
  %1097 = vmatprep.subr.mxu0 0.0
  %1098 = vmatpush2.xpose.msra.mxu0 0.0
  %1099 = vmatprep.subr.mxu0 0.0
  %1100 = vmatpush2.xpose.msra.mxu0 0.0
  %1101 = vmatprep.subr.mxu0 0.0
  %1102 = vmatpush2.xpose.msra.mxu0 0.0
  %1103 = vmatprep.mubr.f32.mxu0 0.0
  %1104 = vmatmul.mubr.f32.gmra.mxu0 %v1033
  %v1105 = vpop.f32.mrf.mxu0
  %v1106 = vadd.f32 0.0, %v1105
  %v1107 = vpop.f32.mrf.mxu0
  %1108 = vdwg.mxu0
  %v1109 = vsel %vm227, %v1106, -inf
  %1110 = vmax.xlane.f32.xlu0 %v1109
  %v1111 = vpop.xlane.xlu0 %1110
  %v1112 = vsub.f32 %v1106, %v1111
  %v1113 = vmul.f32 %v1112, 1.442695
  %v1114 = vpow.pop %v1113
  %v1115 = vsel %vm227, %v1114, 0.0
  %1116 = vadd.xlane.f32.xlu0 %v1115
  %v1117 = vpop.xlane.xlu0 %1116
  %v1118 = vrcp.pop %v1117
  %v1119 = vmul.f32 %v1114, %v1118
  %1120 = vrot.lane.b32.xlu0 %v135, 56
  %v1121 = vpop.permute.xlu0 %1120
  %1122 = vrot.lane.b32.xlu0 %v140, 56
  %v1123 = vpop.permute.xlu0 %1122
  %v1127 = vsel %vm227, %v1119, 0
  %1129 = vmatprep.subr.mxu0 0.0
  %1130 = vmatpush1.msra.mxu0 0.0
  %1131 = vmatprep.subr.mxu0 0.0
  %1132 = vmatpush1.msra.mxu0 0.0
  %1133 = vmatprep.subr.mxu0 0.0
  %1134 = vmatpush1.msra.mxu0 0.0
  %1135 = vmatprep.subr.mxu0 0.0
  %1136 = vmatpush1.msra.mxu0 0.0
  %1137 = vmatprep.subr.mxu0 0.0
  %1138 = vmatpush1.msra.mxu0 0.0
  %1139 = vmatprep.subr.mxu0 0.0
  %1140 = vmatpush1.msra.mxu0 0.0
  %1141 = vmatprep.subr.mxu0 0.0
  %1142 = vmatpush1.msra.mxu0 0.0
  %1143 = vmatprep.subr.mxu0 0.0
  %1144 = vmatpush1.msra.mxu0 0.0
  %1145 = vmatprep.subr.mxu0 0.0
  %1146 = vmatpush1.msra.mxu0 0.0
  %1147 = vmatprep.subr.mxu0 0.0
  %1148 = vmatpush1.msra.mxu0 0.0
  %1149 = vmatprep.subr.mxu0 0.0
  %1150 = vmatpush1.msra.mxu0 0.0
  %1151 = vmatprep.subr.mxu0 0.0
  %1152 = vmatpush1.msra.mxu0 0.0
  %1153 = vmatprep.subr.mxu0 0.0
  %1154 = vmatpush1.msra.mxu0 0.0
  %1155 = vmatprep.subr.mxu0 0.0
  %1156 = vmatpush1.msra.mxu0 0.0
  %1157 = vmatprep.subr.mxu0 0.0
  %1158 = vmatpush1.msra.mxu0 %v1123
  %1159 = vmatprep.subr.mxu0 0.0
  %1160 = vmatpush1.msra.mxu0 %v1121
  %1161 = vmatprep.subr.mxu0 0.0
  %1162 = vmatpush2.msra.mxu0 0.0
  %1163 = vmatprep.subr.mxu0 0.0
  %1164 = vmatpush2.msra.mxu0 0.0
  %1165 = vmatprep.subr.mxu0 0.0
  %1166 = vmatpush2.msra.mxu0 0.0
  %1167 = vmatprep.subr.mxu0 0.0
  %1168 = vmatpush2.msra.mxu0 0.0
  %1169 = vmatprep.subr.mxu0 0.0
  %1170 = vmatpush2.msra.mxu0 0.0
  %1171 = vmatprep.subr.mxu0 0.0
  %1172 = vmatpush2.msra.mxu0 0.0
  %1173 = vmatprep.subr.mxu0 0.0
  %1174 = vmatpush2.msra.mxu0 0.0
  %1175 = vmatprep.subr.mxu0 0.0
  %1176 = vmatpush2.msra.mxu0 0.0
  %1177 = vmatprep.subr.mxu0 0.0
  %1178 = vmatpush2.msra.mxu0 0.0
  %1179 = vmatprep.subr.mxu0 0.0
  %1180 = vmatpush2.msra.mxu0 0.0
  %1181 = vmatprep.subr.mxu0 0.0
  %1182 = vmatpush2.msra.mxu0 0.0
  %1183 = vmatprep.subr.mxu0 0.0
  %1184 = vmatpush2.msra.mxu0 0.0
  %1185 = vmatprep.subr.mxu0 0.0
  %1186 = vmatpush2.msra.mxu0 0.0
  %1187 = vmatprep.subr.mxu0 0.0
  %1188 = vmatpush2.msra.mxu0 0.0
  %1189 = vmatprep.subr.mxu0 0.0
  %1190 = vmatpush2.msra.mxu0 0.0
  %1191 = vmatprep.subr.mxu0 0.0
  %1192 = vmatpush2.msra.mxu0 0.0
  %1193 = vmatprep.mubr.f32.mxu0 0.0
  %1194 = vmatmul.mubr.f32.gmra.mxu0 %v1127
  %v1195 = vpop.f32.mrf.mxu0
  %v1196 = vadd.f32 0.0, %v1195
  %v1197 = vpop.f32.mrf.mxu0
  %1198 = vdwg.mxu0
  %1200 = vrot.lane.b32.xlu0 %v1196, 8
  %v1201 = vpop.permute.xlu0 %1200
  %1203 = vst.msk [vmem:[#allocation2 + $0x8] sm:$0xff] %vm495, %v1201
  %1204 = vrot.lane.b32.xlu0 %v120, 112
  %v1205 = vpop.permute.xlu0 %1204
  %1206 = vrot.lane.b32.xlu0 %v135, 80
  %v1207 = vpop.permute.xlu0 %1206
  %1208 = vrot.lane.b32.xlu0 %v140, 80
  %v1209 = vpop.permute.xlu0 %1208
  %v1210 = vsel %vm149, %v1205, 0
  %v1212 = vsel %vm149, %v1207, 0
  %v1214 = vsel %vm149, %v1209, 0
  %1216 = vmatprep.subr.mxu0 0.0
  %1217 = vmatpush1.xpose.msra.mxu0 0.0
  %1218 = vmatprep.subr.mxu0 0.0
  %1219 = vmatpush1.xpose.msra.mxu0 0.0
  %1220 = vmatprep.subr.mxu0 0.0
  %1221 = vmatpush1.xpose.msra.mxu0 0.0
  %1222 = vmatprep.subr.mxu0 0.0
  %1223 = vmatpush1.xpose.msra.mxu0 0.0
  %1224 = vmatprep.subr.mxu0 0.0
  %1225 = vmatpush1.xpose.msra.mxu0 0.0
  %1226 = vmatprep.subr.mxu0 0.0
  %1227 = vmatpush1.xpose.msra.mxu0 0.0
  %1228 = vmatprep.subr.mxu0 0.0
  %1229 = vmatpush1.xpose.msra.mxu0 0.0
  %1230 = vmatprep.subr.mxu0 0.0
  %1231 = vmatpush1.xpose.msra.mxu0 0.0
  %1232 = vmatprep.subr.mxu0 0.0
  %1233 = vmatpush1.xpose.msra.mxu0 0.0
  %1234 = vmatprep.subr.mxu0 0.0
  %1235 = vmatpush1.xpose.msra.mxu0 0.0
  %1236 = vmatprep.subr.mxu0 0.0
  %1237 = vmatpush1.xpose.msra.mxu0 0.0
  %1238 = vmatprep.subr.mxu0 0.0
  %1239 = vmatpush1.xpose.msra.mxu0 0.0
  %1240 = vmatprep.subr.mxu0 0.0
  %1241 = vmatpush1.xpose.msra.mxu0 0.0
  %1242 = vmatprep.subr.mxu0 0.0
  %1243 = vmatpush1.xpose.msra.mxu0 0.0
  %1244 = vmatprep.subr.mxu0 0.0
  %1245 = vmatpush1.xpose.msra.mxu0 %v1214
  %1246 = vmatprep.subr.mxu0 0.0
  %1247 = vmatpush1.xpose.msra.mxu0 %v1212
  %1248 = vmatprep.subr.mxu0 0.0
  %1249 = vmatpush2.xpose.msra.mxu0 0.0
  %1250 = vmatprep.subr.mxu0 0.0
  %1251 = vmatpush2.xpose.msra.mxu0 0.0
  %1252 = vmatprep.subr.mxu0 0.0
  %1253 = vmatpush2.xpose.msra.mxu0 0.0
  %1254 = vmatprep.subr.mxu0 0.0
  %1255 = vmatpush2.xpose.msra.mxu0 0.0
  %1256 = vmatprep.subr.mxu0 0.0
  %1257 = vmatpush2.xpose.msra.mxu0 0.0
  %1258 = vmatprep.subr.mxu0 0.0
  %1259 = vmatpush2.xpose.msra.mxu0 0.0
  %1260 = vmatprep.subr.mxu0 0.0
  %1261 = vmatpush2.xpose.msra.mxu0 0.0
  %1262 = vmatprep.subr.mxu0 0.0
  %1263 = vmatpush2.xpose.msra.mxu0 0.0
  %1264 = vmatprep.subr.mxu0 0.0
  %1265 = vmatpush2.xpose.msra.mxu0 0.0
  %1266 = vmatprep.subr.mxu0 0.0
  %1267 = vmatpush2.xpose.msra.mxu0 0.0
  %1268 = vmatprep.subr.mxu0 0.0
  %1269 = vmatpush2.xpose.msra.mxu0 0.0
  %1270 = vmatprep.subr.mxu0 0.0
  %1271 = vmatpush2.xpose.msra.mxu0 0.0
  %1272 = vmatprep.subr.mxu0 0.0
  %1273 = vmatpush2.xpose.msra.mxu0 0.0
  %1274 = vmatprep.subr.mxu0 0.0
  %1275 = vmatpush2.xpose.msra.mxu0 0.0
  %1276 = vmatprep.subr.mxu0 0.0
  %1277 = vmatpush2.xpose.msra.mxu0 0.0
  %1278 = vmatprep.subr.mxu0 0.0
  %1279 = vmatpush2.xpose.msra.mxu0 0.0
  %1280 = vmatprep.mubr.f32.mxu0 0.0
  %1281 = vmatmul.mubr.f32.gmra.mxu0 %v1210
  %v1282 = vpop.f32.mrf.mxu0
  %v1283 = vadd.f32 0.0, %v1282
  %v1284 = vpop.f32.mrf.mxu0
  %1285 = vdwg.mxu0
  %v1286 = vsel %vm227, %v1283, -inf
  %1287 = vmax.xlane.f32.xlu0 %v1286
  %v1288 = vpop.xlane.xlu0 %1287
  %v1289 = vsub.f32 %v1283, %v1288
  %v1290 = vmul.f32 %v1289, 1.442695
  %v1291 = vpow.pop %v1290
  %v1292 = vsel %vm227, %v1291, 0.0
  %1293 = vadd.xlane.f32.xlu0 %v1292
  %v1294 = vpop.xlane.xlu0 %1293
  %v1295 = vrcp.pop %v1294
  %v1296 = vmul.f32 %v1291, %v1295
  %1297 = vrot.lane.b32.xlu0 %v135, 48
  %v1298 = vpop.permute.xlu0 %1297
  %1299 = vrot.lane.b32.xlu0 %v140, 48
  %v1300 = vpop.permute.xlu0 %1299
  %v1304 = vsel %vm227, %v1296, 0
  %1306 = vmatprep.subr.mxu0 0.0
  %1307 = vmatpush1.msra.mxu0 0.0
  %1308 = vmatprep.subr.mxu0 0.0
  %1309 = vmatpush1.msra.mxu0 0.0
  %1310 = vmatprep.subr.mxu0 0.0
  %1311 = vmatpush1.msra.mxu0 0.0
  %1312 = vmatprep.subr.mxu0 0.0
  %1313 = vmatpush1.msra.mxu0 0.0
  %1314 = vmatprep.subr.mxu0 0.0
  %1315 = vmatpush1.msra.mxu0 0.0
  %1316 = vmatprep.subr.mxu0 0.0
  %1317 = vmatpush1.msra.mxu0 0.0
  %1318 = vmatprep.subr.mxu0 0.0
  %1319 = vmatpush1.msra.mxu0 0.0
  %1320 = vmatprep.subr.mxu0 0.0
  %1321 = vmatpush1.msra.mxu0 0.0
  %1322 = vmatprep.subr.mxu0 0.0
  %1323 = vmatpush1.msra.mxu0 0.0
  %1324 = vmatprep.subr.mxu0 0.0
  %1325 = vmatpush1.msra.mxu0 0.0
  %1326 = vmatprep.subr.mxu0 0.0
  %1327 = vmatpush1.msra.mxu0 0.0
  %1328 = vmatprep.subr.mxu0 0.0
  %1329 = vmatpush1.msra.mxu0 0.0
  %1330 = vmatprep.subr.mxu0 0.0
  %1331 = vmatpush1.msra.mxu0 0.0
  %1332 = vmatprep.subr.mxu0 0.0
  %1333 = vmatpush1.msra.mxu0 0.0
  %1334 = vmatprep.subr.mxu0 0.0
  %1335 = vmatpush1.msra.mxu0 %v1300
  %1336 = vmatprep.subr.mxu0 0.0
  %1337 = vmatpush1.msra.mxu0 %v1298
  %1338 = vmatprep.subr.mxu0 0.0
  %1339 = vmatpush2.msra.mxu0 0.0
  %1340 = vmatprep.subr.mxu0 0.0
  %1341 = vmatpush2.msra.mxu0 0.0
  %1342 = vmatprep.subr.mxu0 0.0
  %1343 = vmatpush2.msra.mxu0 0.0
  %1344 = vmatprep.subr.mxu0 0.0
  %1345 = vmatpush2.msra.mxu0 0.0
  %1346 = vmatprep.subr.mxu0 0.0
  %1347 = vmatpush2.msra.mxu0 0.0
  %1348 = vmatprep.subr.mxu0 0.0
  %1349 = vmatpush2.msra.mxu0 0.0
  %1350 = vmatprep.subr.mxu0 0.0
  %1351 = vmatpush2.msra.mxu0 0.0
  %1352 = vmatprep.subr.mxu0 0.0
  %1353 = vmatpush2.msra.mxu0 0.0
  %1354 = vmatprep.subr.mxu0 0.0
  %1355 = vmatpush2.msra.mxu0 0.0
  %1356 = vmatprep.subr.mxu0 0.0
  %1357 = vmatpush2.msra.mxu0 0.0
  %1358 = vmatprep.subr.mxu0 0.0
  %1359 = vmatpush2.msra.mxu0 0.0
  %1360 = vmatprep.subr.mxu0 0.0
  %1361 = vmatpush2.msra.mxu0 0.0
  %1362 = vmatprep.subr.mxu0 0.0
  %1363 = vmatpush2.msra.mxu0 0.0
  %1364 = vmatprep.subr.mxu0 0.0
  %1365 = vmatpush2.msra.mxu0 0.0
  %1366 = vmatprep.subr.mxu0 0.0
  %1367 = vmatpush2.msra.mxu0 0.0
  %1368 = vmatprep.subr.mxu0 0.0
  %1369 = vmatpush2.msra.mxu0 0.0
  %1370 = vmatprep.mubr.f32.mxu0 0.0
  %1371 = vmatmul.mubr.f32.gmra.mxu0 %v1304
  %v1372 = vpop.f32.mrf.mxu0
  %v1373 = vadd.f32 0.0, %v1372
  %v1374 = vpop.f32.mrf.mxu0
  %1375 = vdwg.mxu0
  %1377 = vrot.lane.b32.xlu0 %v1373, 16
  %v1378 = vpop.permute.xlu0 %1377
  %1380 = vst.msk [vmem:[#allocation2 + $0x8] sm:$0xff] %vm673, %v1378
  %1381 = vrot.lane.b32.xlu0 %v120, 104
  %v1382 = vpop.permute.xlu0 %1381
  %1383 = vrot.lane.b32.xlu0 %v135, 72
  %v1384 = vpop.permute.xlu0 %1383
  %1385 = vrot.lane.b32.xlu0 %v140, 72
  %v1386 = vpop.permute.xlu0 %1385
  %v1387 = vsel %vm149, %v1382, 0
  %v1389 = vsel %vm149, %v1384, 0
  %v1391 = vsel %vm149, %v1386, 0
  %1393 = vmatprep.subr.mxu0 0.0
  %1394 = vmatpush1.xpose.msra.mxu0 0.0
  %1395 = vmatprep.subr.mxu0 0.0
  %1396 = vmatpush1.xpose.msra.mxu0 0.0
  %1397 = vmatprep.subr.mxu0 0.0
  %1398 = vmatpush1.xpose.msra.mxu0 0.0
  %1399 = vmatprep.subr.mxu0 0.0
  %1400 = vmatpush1.xpose.msra.mxu0 0.0
  %1401 = vmatprep.subr.mxu0 0.0
  %1402 = vmatpush1.xpose.msra.mxu0 0.0
  %1403 = vmatprep.subr.mxu0 0.0
  %1404 = vmatpush1.xpose.msra.mxu0 0.0
  %1405 = vmatprep.subr.mxu0 0.0
  %1406 = vmatpush1.xpose.msra.mxu0 0.0
  %1407 = vmatprep.subr.mxu0 0.0
  %1408 = vmatpush1.xpose.msra.mxu0 0.0
  %1409 = vmatprep.subr.mxu0 0.0
  %1410 = vmatpush1.xpose.msra.mxu0 0.0
  %1411 = vmatprep.subr.mxu0 0.0
  %1412 = vmatpush1.xpose.msra.mxu0 0.0
  %1413 = vmatprep.subr.mxu0 0.0
  %1414 = vmatpush1.xpose.msra.mxu0 0.0
  %1415 = vmatprep.subr.mxu0 0.0
  %1416 = vmatpush1.xpose.msra.mxu0 0.0
  %1417 = vmatprep.subr.mxu0 0.0
  %1418 = vmatpush1.xpose.msra.mxu0 0.0
  %1419 = vmatprep.subr.mxu0 0.0
  %1420 = vmatpush1.xpose.msra.mxu0 0.0
  %1421 = vmatprep.subr.mxu0 0.0
  %1422 = vmatpush1.xpose.msra.mxu0 %v1391
  %1423 = vmatprep.subr.mxu0 0.0
  %1424 = vmatpush1.xpose.msra.mxu0 %v1389
  %1425 = vmatprep.subr.mxu0 0.0
  %1426 = vmatpush2.xpose.msra.mxu0 0.0
  %1427 = vmatprep.subr.mxu0 0.0
  %1428 = vmatpush2.xpose.msra.mxu0 0.0
  %1429 = vmatprep.subr.mxu0 0.0
  %1430 = vmatpush2.xpose.msra.mxu0 0.0
  %1431 = vmatprep.subr.mxu0 0.0
  %1432 = vmatpush2.xpose.msra.mxu0 0.0
  %1433 = vmatprep.subr.mxu0 0.0
  %1434 = vmatpush2.xpose.msra.mxu0 0.0
  %1435 = vmatprep.subr.mxu0 0.0
  %1436 = vmatpush2.xpose.msra.mxu0 0.0
  %1437 = vmatprep.subr.mxu0 0.0
  %1438 = vmatpush2.xpose.msra.mxu0 0.0
  %1439 = vmatprep.subr.mxu0 0.0
  %1440 = vmatpush2.xpose.msra.mxu0 0.0
  %1441 = vmatprep.subr.mxu0 0.0
  %1442 = vmatpush2.xpose.msra.mxu0 0.0
  %1443 = vmatprep.subr.mxu0 0.0
  %1444 = vmatpush2.xpose.msra.mxu0 0.0
  %1445 = vmatprep.subr.mxu0 0.0
  %1446 = vmatpush2.xpose.msra.mxu0 0.0
  %1447 = vmatprep.subr.mxu0 0.0
  %1448 = vmatpush2.xpose.msra.mxu0 0.0
  %1449 = vmatprep.subr.mxu0 0.0
  %1450 = vmatpush2.xpose.msra.mxu0 0.0
  %1451 = vmatprep.subr.mxu0 0.0
  %1452 = vmatpush2.xpose.msra.mxu0 0.0
  %1453 = vmatprep.subr.mxu0 0.0
  %1454 = vmatpush2.xpose.msra.mxu0 0.0
  %1455 = vmatprep.subr.mxu0 0.0
  %1456 = vmatpush2.xpose.msra.mxu0 0.0
  %1457 = vmatprep.mubr.f32.mxu0 0.0
  %1458 = vmatmul.mubr.f32.gmra.mxu0 %v1387
  %v1459 = vpop.f32.mrf.mxu0
  %v1460 = vadd.f32 0.0, %v1459
  %v1461 = vpop.f32.mrf.mxu0
  %1462 = vdwg.mxu0
  %v1463 = vsel %vm227, %v1460, -inf
  %1464 = vmax.xlane.f32.xlu0 %v1463
  %v1465 = vpop.xlane.xlu0 %1464
  %v1466 = vsub.f32 %v1460, %v1465
  %v1467 = vmul.f32 %v1466, 1.442695
  %v1468 = vpow.pop %v1467
  %v1469 = vsel %vm227, %v1468, 0.0
  %1470 = vadd.xlane.f32.xlu0 %v1469
  %v1471 = vpop.xlane.xlu0 %1470
  %v1472 = vrcp.pop %v1471
  %v1473 = vmul.f32 %v1468, %v1472
  %1474 = vrot.lane.b32.xlu0 %v135, 40
  %v1475 = vpop.permute.xlu0 %1474
  %1476 = vrot.lane.b32.xlu0 %v140, 40
  %v1477 = vpop.permute.xlu0 %1476
  %v1481 = vsel %vm227, %v1473, 0
  %1483 = vmatprep.subr.mxu0 0.0
  %1484 = vmatpush1.msra.mxu0 0.0
  %1485 = vmatprep.subr.mxu0 0.0
  %1486 = vmatpush1.msra.mxu0 0.0
  %1487 = vmatprep.subr.mxu0 0.0
  %1488 = vmatpush1.msra.mxu0 0.0
  %1489 = vmatprep.subr.mxu0 0.0
  %1490 = vmatpush1.msra.mxu0 0.0
  %1491 = vmatprep.subr.mxu0 0.0
  %1492 = vmatpush1.msra.mxu0 0.0
  %1493 = vmatprep.subr.mxu0 0.0
  %1494 = vmatpush1.msra.mxu0 0.0
  %1495 = vmatprep.subr.mxu0 0.0
  %1496 = vmatpush1.msra.mxu0 0.0
  %1497 = vmatprep.subr.mxu0 0.0
  %1498 = vmatpush1.msra.mxu0 0.0
  %1499 = vmatprep.subr.mxu0 0.0
  %1500 = vmatpush1.msra.mxu0 0.0
  %1501 = vmatprep.subr.mxu0 0.0
  %1502 = vmatpush1.msra.mxu0 0.0
  %1503 = vmatprep.subr.mxu0 0.0
  %1504 = vmatpush1.msra.mxu0 0.0
  %1505 = vmatprep.subr.mxu0 0.0
  %1506 = vmatpush1.msra.mxu0 0.0
  %1507 = vmatprep.subr.mxu0 0.0
  %1508 = vmatpush1.msra.mxu0 0.0
  %1509 = vmatprep.subr.mxu0 0.0
  %1510 = vmatpush1.msra.mxu0 0.0
  %1511 = vmatprep.subr.mxu0 0.0
  %1512 = vmatpush1.msra.mxu0 %v1477
  %1513 = vmatprep.subr.mxu0 0.0
  %1514 = vmatpush1.msra.mxu0 %v1475
  %1515 = vmatprep.subr.mxu0 0.0
  %1516 = vmatpush2.msra.mxu0 0.0
  %1517 = vmatprep.subr.mxu0 0.0
  %1518 = vmatpush2.msra.mxu0 0.0
  %1519 = vmatprep.subr.mxu0 0.0
  %1520 = vmatpush2.msra.mxu0 0.0
  %1521 = vmatprep.subr.mxu0 0.0
  %1522 = vmatpush2.msra.mxu0 0.0
  %1523 = vmatprep.subr.mxu0 0.0
  %1524 = vmatpush2.msra.mxu0 0.0
  %1525 = vmatprep.subr.mxu0 0.0
  %1526 = vmatpush2.msra.mxu0 0.0
  %1527 = vmatprep.subr.mxu0 0.0
  %1528 = vmatpush2.msra.mxu0 0.0
  %1529 = vmatprep.subr.mxu0 0.0
  %1530 = vmatpush2.msra.mxu0 0.0
  %1531 = vmatprep.subr.mxu0 0.0
  %1532 = vmatpush2.msra.mxu0 0.0
  %1533 = vmatprep.subr.mxu0 0.0
  %1534 = vmatpush2.msra.mxu0 0.0
  %1535 = vmatprep.subr.mxu0 0.0
  %1536 = vmatpush2.msra.mxu0 0.0
  %1537 = vmatprep.subr.mxu0 0.0
  %1538 = vmatpush2.msra.mxu0 0.0
  %1539 = vmatprep.subr.mxu0 0.0
  %1540 = vmatpush2.msra.mxu0 0.0
  %1541 = vmatprep.subr.mxu0 0.0
  %1542 = vmatpush2.msra.mxu0 0.0
  %1543 = vmatprep.subr.mxu0 0.0
  %1544 = vmatpush2.msra.mxu0 0.0
  %1545 = vmatprep.subr.mxu0 0.0
  %1546 = vmatpush2.msra.mxu0 0.0
  %1547 = vmatprep.mubr.f32.mxu0 0.0
  %1548 = vmatmul.mubr.f32.gmra.mxu0 %v1481
  %v1549 = vpop.f32.mrf.mxu0
  %v1550 = vadd.f32 0.0, %v1549
  %v1551 = vpop.f32.mrf.mxu0
  %1552 = vdwg.mxu0
  %1554 = vrot.lane.b32.xlu0 %v1550, 24
  %v1555 = vpop.permute.xlu0 %1554
  %1557 = vst.msk [vmem:[#allocation2 + $0x8] sm:$0xff] %vm851, %v1555
  %v1558 = vld [vmem:[#allocation2] sm:$0xff]
  %v1559 = vld [vmem:[#allocation2 + $0x8] sm:$0xff]
  %v1560 = vld [vmem:[%s1] sm:$0xff]
  %v1561 = vld [vmem:[%s1 + $0x10] sm:$0xff]
  %v1562 = vld [vmem:[%s1 + $0x20] sm:$0xff]
  %v1563 = vld [vmem:[%s1 + $0x30] sm:$0xff]
  %v1564 = vld [vmem:[%s2 + $0x1] sm:$0x1]
  %v1565 = vlaneseq
  %v1566 = vshrl.u32 %v1565, 7
  %v1567 = vsub.s32 0, %v1566
  %v1568 = vrot.slane %v1564, %v1567
  %1573 = vrot.lane.b32.xlu0 %v1560, 32
  %v1574 = vpop.permute.xlu0 %1573
  %1575 = vrot.lane.b32.xlu0 %v1561, 32
  %v1576 = vpop.permute.xlu0 %1575
  %1577 = vrot.lane.b32.xlu0 %v1562, 32
  %v1578 = vpop.permute.xlu0 %1577
  %1579 = vrot.lane.b32.xlu0 %v1563, 32
  %v1580 = vpop.permute.xlu0 %1579
  %v1586 = vsel %vm29, %v1558, 0
  %v1589 = vsel %vm29, %v1559, 0
  %1591 = vmatprep.subr.mxu0 0.0
  %1592 = vmatpush1.msra.mxu0 0.0
  %1593 = vmatprep.subr.mxu0 0.0
  %1594 = vmatpush1.msra.mxu0 0.0
  %1595 = vmatprep.subr.mxu0 0.0
  %1596 = vmatpush1.msra.mxu0 0.0
  %1597 = vmatprep.subr.mxu0 0.0
  %1598 = vmatpush1.msra.mxu0 0.0
  %1599 = vmatprep.subr.mxu0 0.0
  %1600 = vmatpush1.msra.mxu0 0.0
  %1601 = vmatprep.subr.mxu0 0.0
  %1602 = vmatpush1.msra.mxu0 0.0
  %1603 = vmatprep.subr.mxu0 0.0
  %1604 = vmatpush1.msra.mxu0 0.0
  %1605 = vmatprep.subr.mxu0 0.0
  %1606 = vmatpush1.msra.mxu0 0.0
  %1607 = vmatprep.subr.mxu0 0.0
  %1608 = vmatpush1.msra.mxu0 0.0
  %1609 = vmatprep.subr.mxu0 0.0
  %1610 = vmatpush1.msra.mxu0 0.0
  %1611 = vmatprep.subr.mxu0 0.0
  %1612 = vmatpush1.msra.mxu0 0.0
  %1613 = vmatprep.subr.mxu0 0.0
  %1614 = vmatpush1.msra.mxu0 0.0
  %1615 = vmatprep.subr.mxu0 0.0
  %1616 = vmatpush1.msra.mxu0 %v1580
  %1617 = vmatprep.subr.mxu0 0.0
  %1618 = vmatpush1.msra.mxu0 %v1578
  %1619 = vmatprep.subr.mxu0 0.0
  %1620 = vmatpush1.msra.mxu0 %v1576
  %1621 = vmatprep.subr.mxu0 0.0
  %1622 = vmatpush1.msra.mxu0 %v1574
  %1623 = vmatprep.subr.mxu0 0.0
  %1624 = vmatpush2.msra.mxu0 0.0
  %1625 = vmatprep.subr.mxu0 0.0
  %1626 = vmatpush2.msra.mxu0 0.0
  %1627 = vmatprep.subr.mxu0 0.0
  %1628 = vmatpush2.msra.mxu0 0.0
  %1629 = vmatprep.subr.mxu0 0.0
  %1630 = vmatpush2.msra.mxu0 0.0
  %1631 = vmatprep.subr.mxu0 0.0
  %1632 = vmatpush2.msra.mxu0 0.0
  %1633 = vmatprep.subr.mxu0 0.0
  %1634 = vmatpush2.msra.mxu0 0.0
  %1635 = vmatprep.subr.mxu0 0.0
  %1636 = vmatpush2.msra.mxu0 0.0
  %1637 = vmatprep.subr.mxu0 0.0
  %1638 = vmatpush2.msra.mxu0 0.0
  %1639 = vmatprep.subr.mxu0 0.0
  %1640 = vmatpush2.msra.mxu0 0.0
  %1641 = vmatprep.subr.mxu0 0.0
  %1642 = vmatpush2.msra.mxu0 0.0
  %1643 = vmatprep.subr.mxu0 0.0
  %1644 = vmatpush2.msra.mxu0 0.0
  %1645 = vmatprep.subr.mxu0 0.0
  %1646 = vmatpush2.msra.mxu0 0.0
  %1647 = vmatprep.subr.mxu0 0.0
  %1648 = vmatpush2.msra.mxu0 0.0
  %1649 = vmatprep.subr.mxu0 0.0
  %1650 = vmatpush2.msra.mxu0 0.0
  %1651 = vmatprep.subr.mxu0 0.0
  %1652 = vmatpush2.msra.mxu0 0.0
  %1653 = vmatprep.subr.mxu0 0.0
  %1654 = vmatpush2.msra.mxu0 0.0
  %1655 = vmatprep.mubr.f32.mxu0 0.0
  %1656 = vmatmul.mubr.f32.gmra.mxu0 %v1586
  %v1657 = vpop.f32.mrf.mxu0
  %v1658 = vadd.f32 %v1568, %v1657
  %v1659 = vpop.f32.mrf.mxu0
  %1660 = vmatprep.mubr.f32.mxu0 0.0
  %1661 = vmatmul.mubr.f32.gmra.mxu0 %v1589
  %v1662 = vpop.f32.mrf.mxu0
  %v1663 = vadd.f32 %v1568, %v1662
  %v1664 = vpop.f32.mrf.mxu0
  %1665 = vdwg.mxu0
  %v1666 = vadd.f32 %v14, %v1658
  %v1667 = vadd.f32 %v15, %v1663
  %v1668 = vld [vmem:[%s2 + $0x4] sm:$0x1]
  %v1669 = vld [vmem:[%s2 + $0x5] sm:$0x1]
  %v1670 = vsel %vm29, %v1666, 0.0
  %1671 = vadd.xlane.f32.xlu0 %v1670
  %v1672 = vpop.xlane.xlu0 %1671
  %v1673 = vsel %vm29, %v1667, 0.0
  %1674 = vadd.xlane.f32.xlu0 %v1673
  %v1675 = vpop.xlane.xlu0 %1674
  %v1676 = vrcp.pop 32.0
  %v1677 = vmul.f32 %v1672, %v1676
  %v1678 = vmul.f32 %v1675, %v1676
  %v1679 = vsub.f32 %v1666, %v1677
  %v1680 = vsub.f32 %v1667, %v1678
  %v1681 = vmul.f32 %v1679, %v1679
  %v1682 = vmul.f32 %v1680, %v1680
  %v1683 = vsel %vm29, %v1681, 0.0
  %1684 = vadd.xlane.f32.xlu0 %v1683
  %v1685 = vpop.xlane.xlu0 %1684
  %v1686 = vsel %vm29, %v1682, 0.0
  %1687 = vadd.xlane.f32.xlu0 %v1686
  %v1688 = vpop.xlane.xlu0 %1687
  %v1689 = vmul.f32 %v1685, %v1676
  %v1690 = vmul.f32 %v1688, %v1676
  %v1691 = vadd.f32 %v1689, 1e-05
  %v1692 = vadd.f32 %v1690, 1e-05
  %v1693 = vrsqrt.pop %v1691
  %v1694 = vrsqrt.pop %v1692
  %v1695 = vmul.f32 %v1679, %v1693
  %v1696 = vmul.f32 %v1680, %v1694
  %v1697 = vlaneseq
  %v1698 = vshrl.u32 %v1697, 7
  %v1699 = vsub.s32 0, %v1698
  %v1700 = vrot.slane %v1668, %v1699
  %v1701 = vmul.f32 %v1695, %v1700
  %v1702 = vmul.f32 %v1696, %v1700
  %v1703 = vlaneseq
  %v1704 = vshrl.u32 %v1703, 7
  %v1705 = vsub.s32 0, %v1704
  %v1706 = vrot.slane %v1669, %v1705
  %v1707 = vadd.f32 %v1701, %v1706
  %v1708 = vadd.f32 %v1702, %v1706
  %v1709 = vld [vmem:[%s1 + $0x8] sm:$0xff]
  %v1710 = vld [vmem:[%s1 + $0x18] sm:$0xff]
  %v1711 = vld [vmem:[%s1 + $0x28] sm:$0xff]
  %v1712 = vld [vmem:[%s1 + $0x38] sm:$0xff]
  %v1713 = vld [vmem:[%s2 + $0x2] sm:$0x1]
  %v1714 = vlaneseq
  %v1715 = vshrl.u32 %v1714, 7
  %v1716 = vsub.s32 0, %v1715
  %v1717 = vrot.slane %v1713, %v1716
  %v1719 = vsel %vm29, %v1707, 0
  %v1722 = vsel %vm29, %v1708, 0
  %1724 = vmatprep.subr.mxu0 0.0
  %1725 = vmatpush1.msra.mxu0 0.0
  %1726 = vmatprep.subr.mxu0 0.0
  %1727 = vmatpush1.msra.mxu0 0.0
  %1728 = vmatprep.subr.mxu0 0.0
  %1729 = vmatpush1.msra.mxu0 0.0
  %1730 = vmatprep.subr.mxu0 0.0
  %1731 = vmatpush1.msra.mxu0 0.0
  %1732 = vmatprep.subr.mxu0 0.0
  %1733 = vmatpush1.msra.mxu0 0.0
  %1734 = vmatprep.subr.mxu0 0.0
  %1735 = vmatpush1.msra.mxu0 0.0
  %1736 = vmatprep.subr.mxu0 0.0
  %1737 = vmatpush1.msra.mxu0 0.0
  %1738 = vmatprep.subr.mxu0 0.0
  %1739 = vmatpush1.msra.mxu0 0.0
  %1740 = vmatprep.subr.mxu0 0.0
  %1741 = vmatpush1.msra.mxu0 0.0
  %1742 = vmatprep.subr.mxu0 0.0
  %1743 = vmatpush1.msra.mxu0 0.0
  %1744 = vmatprep.subr.mxu0 0.0
  %1745 = vmatpush1.msra.mxu0 0.0
  %1746 = vmatprep.subr.mxu0 0.0
  %1747 = vmatpush1.msra.mxu0 0.0
  %1748 = vmatprep.subr.mxu0 0.0
  %1749 = vmatpush1.msra.mxu0 %v1712
  %1750 = vmatprep.subr.mxu0 0.0
  %1751 = vmatpush1.msra.mxu0 %v1711
  %1752 = vmatprep.subr.mxu0 0.0
  %1753 = vmatpush1.msra.mxu0 %v1710
  %1754 = vmatprep.subr.mxu0 0.0
  %1755 = vmatpush1.msra.mxu0 %v1709
  %1756 = vmatprep.subr.mxu0 0.0
  %1757 = vmatpush2.msra.mxu0 0.0
  %1758 = vmatprep.subr.mxu0 0.0
  %1759 = vmatpush2.msra.mxu0 0.0
  %1760 = vmatprep.subr.mxu0 0.0
  %1761 = vmatpush2.msra.mxu0 0.0
  %1762 = vmatprep.subr.mxu0 0.0
  %1763 = vmatpush2.msra.mxu0 0.0
  %1764 = vmatprep.subr.mxu0 0.0
  %1765 = vmatpush2.msra.mxu0 0.0
  %1766 = vmatprep.subr.mxu0 0.0
  %1767 = vmatpush2.msra.mxu0 0.0
  %1768 = vmatprep.subr.mxu0 0.0
  %1769 = vmatpush2.msra.mxu0 0.0
  %1770 = vmatprep.subr.mxu0 0.0
  %1771 = vmatpush2.msra.mxu0 0.0
  %1772 = vmatprep.subr.mxu0 0.0
  %1773 = vmatpush2.msra.mxu0 0.0
  %1774 = vmatprep.subr.mxu0 0.0
  %1775 = vmatpush2.msra.mxu0 0.0
  %1776 = vmatprep.subr.mxu0 0.0
  %1777 = vmatpush2.msra.mxu0 0.0
  %1778 = vmatprep.subr.mxu0 0.0
  %1779 = vmatpush2.msra.mxu0 0.0
  %1780 = vmatprep.subr.mxu0 0.0
  %1781 = vmatpush2.msra.mxu0 0.0
  %1782 = vmatprep.subr.mxu0 0.0
  %1783 = vmatpush2.msra.mxu0 0.0
  %1784 = vmatprep.subr.mxu0 0.0
  %1785 = vmatpush2.msra.mxu0 0.0
  %1786 = vmatprep.subr.mxu0 0.0
  %1787 = vmatpush2.msra.mxu0 0.0
  %1788 = vmatprep.mubr.f32.mxu0 0.0
  %1789 = vmatmul.mubr.f32.gmra.mxu0 %v1719
  %v1790 = vpop.f32.mrf.mxu0
  %v1791 = vadd.f32 %v1717, %v1790
  %v1792 = vpop.f32.mrf.mxu0
  %1793 = vmatprep.mubr.f32.mxu0 0.0
  %1794 = vmatmul.mubr.f32.gmra.mxu0 %v1722
  %v1795 = vpop.f32.mrf.mxu0
  %v1796 = vadd.f32 %v1717, %v1795
  %v1797 = vpop.f32.mrf.mxu0
  %1798 = vdwg.mxu0
  %v1799 = vmax.f32 %v1791, 0.0
  %v1800 = vmax.f32 %v1796, 0.0
  %v1801 = vld [vmem:[%s2 + $0x3] sm:$0x1]
  %v1802 = vlaneseq
  %v1803 = vshrl.u32 %v1802, 7
  %v1804 = vsub.s32 0, %v1803
  %v1805 = vrot.slane %v1801, %v1804
  %1810 = vrot.lane.b32.xlu0 %v1709, 64
  %v1811 = vpop.permute.xlu0 %1810
  %1812 = vrot.lane.b32.xlu0 %v1710, 64
  %v1813 = vpop.permute.xlu0 %1812
  %1814 = vrot.lane.b32.xlu0 %v1711, 64
  %v1815 = vpop.permute.xlu0 %1814
  %1816 = vrot.lane.b32.xlu0 %v1712, 64
  %v1817 = vpop.permute.xlu0 %1816
  %vm1818 = vcmask 523264
  %v1820 = vsel %vm1818, %v1799, 0
  %v1823 = vsel %vm1818, %v1800, 0
  %v1825 = vsel %vm1818, %v1811, 0
  %v1827 = vsel %vm1818, %v1813, 0
  %v1829 = vsel %vm1818, %v1815, 0
  %v1831 = vsel %vm1818, %v1817, 0
  %1833 = vmatprep.subr.mxu0 0.0
  %1834 = vmatpush1.xpose.msra.mxu0 0.0
  %1835 = vmatprep.subr.mxu0 0.0
  %1836 = vmatpush1.xpose.msra.mxu0 0.0
  %1837 = vmatprep.subr.mxu0 0.0
  %1838 = vmatpush1.xpose.msra.mxu0 0.0
  %1839 = vmatprep.subr.mxu0 0.0
  %1840 = vmatpush1.xpose.msra.mxu0 0.0
  %1841 = vmatprep.subr.mxu0 0.0
  %1842 = vmatpush1.xpose.msra.mxu0 0.0
  %1843 = vmatprep.subr.mxu0 0.0
  %1844 = vmatpush1.xpose.msra.mxu0 0.0
  %1845 = vmatprep.subr.mxu0 0.0
  %1846 = vmatpush1.xpose.msra.mxu0 0.0
  %1847 = vmatprep.subr.mxu0 0.0
  %1848 = vmatpush1.xpose.msra.mxu0 0.0
  %1849 = vmatprep.subr.mxu0 0.0
  %1850 = vmatpush1.xpose.msra.mxu0 0.0
  %1851 = vmatprep.subr.mxu0 0.0
  %1852 = vmatpush1.xpose.msra.mxu0 0.0
  %1853 = vmatprep.subr.mxu0 0.0
  %1854 = vmatpush1.xpose.msra.mxu0 0.0
  %1855 = vmatprep.subr.mxu0 0.0
  %1856 = vmatpush1.xpose.msra.mxu0 0.0
  %1857 = vmatprep.subr.mxu0 0.0
  %1858 = vmatpush1.xpose.msra.mxu0 %v1831
  %1859 = vmatprep.subr.mxu0 0.0
  %1860 = vmatpush1.xpose.msra.mxu0 %v1829
  %1861 = vmatprep.subr.mxu0 0.0
  %1862 = vmatpush1.xpose.msra.mxu0 %v1827
  %1863 = vmatprep.subr.mxu0 0.0
  %1864 = vmatpush1.xpose.msra.mxu0 %v1825
  %1865 = vmatprep.subr.mxu0 0.0
  %1866 = vmatpush2.xpose.msra.mxu0 0.0
  %1867 = vmatprep.subr.mxu0 0.0
  %1868 = vmatpush2.xpose.msra.mxu0 0.0
  %1869 = vmatprep.subr.mxu0 0.0
  %1870 = vmatpush2.xpose.msra.mxu0 0.0
  %1871 = vmatprep.subr.mxu0 0.0
  %1872 = vmatpush2.xpose.msra.mxu0 0.0
  %1873 = vmatprep.subr.mxu0 0.0
  %1874 = vmatpush2.xpose.msra.mxu0 0.0
  %1875 = vmatprep.subr.mxu0 0.0
  %1876 = vmatpush2.xpose.msra.mxu0 0.0
  %1877 = vmatprep.subr.mxu0 0.0
  %1878 = vmatpush2.xpose.msra.mxu0 0.0
  %1879 = vmatprep.subr.mxu0 0.0
  %1880 = vmatpush2.xpose.msra.mxu0 0.0
  %1881 = vmatprep.subr.mxu0 0.0
  %1882 = vmatpush2.xpose.msra.mxu0 0.0
  %1883 = vmatprep.subr.mxu0 0.0
  %1884 = vmatpush2.xpose.msra.mxu0 0.0
  %1885 = vmatprep.subr.mxu0 0.0
  %1886 = vmatpush2.xpose.msra.mxu0 0.0
  %1887 = vmatprep.subr.mxu0 0.0
  %1888 = vmatpush2.xpose.msra.mxu0 0.0
  %1889 = vmatprep.subr.mxu0 0.0
  %1890 = vmatpush2.xpose.msra.mxu0 0.0
  %1891 = vmatprep.subr.mxu0 0.0
  %1892 = vmatpush2.xpose.msra.mxu0 0.0
  %1893 = vmatprep.subr.mxu0 0.0
  %1894 = vmatpush2.xpose.msra.mxu0 0.0
  %1895 = vmatprep.subr.mxu0 0.0
  %1896 = vmatpush2.xpose.msra.mxu0 0.0
  %1897 = vmatprep.mubr.f32.mxu0 0.0
  %1898 = vmatmul.mubr.f32.gmra.mxu0 %v1820
  %v1899 = vpop.f32.mrf.mxu0
  %v1900 = vadd.f32 %v1805, %v1899
  %v1901 = vpop.f32.mrf.mxu0
  %1902 = vmatprep.mubr.f32.mxu0 0.0
  %1903 = vmatmul.mubr.f32.gmra.mxu0 %v1823
  %v1904 = vpop.f32.mrf.mxu0
  %v1905 = vadd.f32 %v1805, %v1904
  %v1906 = vpop.f32.mrf.mxu0
  %1907 = vdwg.mxu0
  %v1908 = vadd.f32 %v1707, %v1900
  %v1909 = vadd.f32 %v1708, %v1905
  %v1910 = vld [vmem:[%s2 + $0x6] sm:$0x1]
  %v1911 = vld [vmem:[%s2 + $0x7] sm:$0x1]
  %v1912 = vsel %vm29, %v1908, 0.0
  %1913 = vadd.xlane.f32.xlu0 %v1912
  %v1914 = vpop.xlane.xlu0 %1913
  %v1915 = vsel %vm29, %v1909, 0.0
  %1916 = vadd.xlane.f32.xlu0 %v1915
  %v1917 = vpop.xlane.xlu0 %1916
  %v1918 = vmul.f32 %v1914, %v1676
  %v1919 = vmul.f32 %v1917, %v1676
  %v1920 = vsub.f32 %v1908, %v1918
  %v1921 = vsub.f32 %v1909, %v1919
  %v1922 = vmul.f32 %v1920, %v1920
  %v1923 = vmul.f32 %v1921, %v1921
  %v1924 = vsel %vm29, %v1922, 0.0
  %1925 = vadd.xlane.f32.xlu0 %v1924
  %v1926 = vpop.xlane.xlu0 %1925
  %v1927 = vsel %vm29, %v1923, 0.0
  %1928 = vadd.xlane.f32.xlu0 %v1927
  %v1929 = vpop.xlane.xlu0 %1928
  %v1930 = vmul.f32 %v1926, %v1676
  %v1931 = vmul.f32 %v1929, %v1676
  %v1932 = vadd.f32 %v1930, 1e-05
  %v1933 = vadd.f32 %v1931, 1e-05
  %v1934 = vrsqrt.pop %v1932
  %v1935 = vrsqrt.pop %v1933
  %v1936 = vmul.f32 %v1920, %v1934
  %v1937 = vmul.f32 %v1921, %v1935
  %v1938 = vlaneseq
  %v1939 = vshrl.u32 %v1938, 7
  %v1940 = vsub.s32 0, %v1939
  %v1941 = vrot.slane %v1910, %v1940
  %v1942 = vmul.f32 %v1936, %v1941
  %v1943 = vmul.f32 %v1937, %v1941
  %v1944 = vlaneseq
  %v1945 = vshrl.u32 %v1944, 7
  %v1946 = vsub.s32 0, %v1945
  %v1947 = vrot.slane %v1911, %v1946
  %v1948 = vadd.f32 %v1942, %v1947
  %v1949 = vadd.f32 %v1943, %v1947
  %1950 = vst.msk [vmem:[%s3] sm:$0xff] %vm29, %v1948
  %1951 = vst.msk [vmem:[%s3 + $0x8] sm:$0xff] %vm29, %v1949
  // Predicated region
  $region14: #{transformer_pallas.1} parent=0 // pred_check
    _
  $region15: #{transformer_pallas.1} parent=0 // pred_check_branch
    %1953 = sbr.rel (0) target = $region17
  $region16: #{transformer_pallas.1} parent=0 // pred_region
    _
  $region17: #{transformer_pallas.1} parent=0 // pred_fallthru
    _
  // Predicated region
  $region18: #{transformer_pallas.1} parent=0 // pred_check
    _
  $region19: #{transformer_pallas.1} parent=0 // pred_check_branch
    %1955 = sbr.rel (0) target = $region21
  $region20: #{transformer_pallas.1} parent=0 // pred_region
    _
  $region21: #{transformer_pallas.1} parent=0 // pred_fallthru
    _

</llo_original>
